<compile_context>
chip_gen: v5e
topology: v5e:2x2
jax: 0.10.0
libtpu: 0.0.40
codegen_flags: <defaults>
</compile_context>

<pallas_src>
import functools

import jax
import jax.numpy as jnp
from jax.experimental import pallas as pl
from jax.experimental.pallas import tpu as pltpu

LRELU_SLOPE = 0.2
BN_EPS = 1e-5
LN_EPS = 1e-5


# ----------------------------- fused Pallas kernel ---------------------------

def discriminator_kernel(
    p1_ref, y_ref,
    wc1_ref, g1_ref, b1_ref,
    wc2_ref, g2_ref, b2_ref,
    wc3_ref, g3_ref, b3_ref,
    w1_ref, bl1_ref, lng_ref, lnb_ref, w2_ref, bl2_ref,
    o_ref,
    *, n, h_a1, w_a1,
):
    def lrelu(v):
        return jnp.where(v > 0, v, LRELU_SLOPE * v)

    def bn_lrelu(acc, g_ref, b_ref):
        # BatchNorm2d, training-mode batch stats over rows = (h, w, n); lanes = channels.
        mean = jnp.mean(acc, axis=0, keepdims=True)
        var = jnp.mean((acc - mean) * (acc - mean), axis=0, keepdims=True)
        yn = (acc - mean) * jax.lax.rsqrt(var + BN_EPS) * g_ref[...] + b_ref[...]
        return lrelu(yn)

    def conv_gemm(patch, w_ref, g_ref, b_ref):
        # ONE stacked GEMM per conv: patch [M, 9*Ci] @ W [9*Ci, Co].
        acc = jnp.dot(patch, w_ref[...], preferred_element_type=jnp.float32)
        return bn_lrelu(acc, g_ref, b_ref)

    def im2col(a, hh, ww):
        # a: [hh*ww*n, C] activation, rows ordered (h, w, n).  Builds the k=3/s=2/p=1
        # patch matrix [(hh//2)*(ww//2)*n, 9*C] (rows (r, c, n); lanes (tap, channel))
        # using only static contiguous slices + concatenates (vld/vst + XLU) --
        # no selection GEMMs, no gathers, no strided access.
        cc = a.shape[1]
        ho, wo = hh // 2, ww // 2
        zero = jnp.zeros((n, cc), jnp.float32)

        def pix(h, w):
            if 0 <= h < hh and 0 <= w < ww:
                r0 = (h * ww + w) * n
                return a[r0:r0 + n, :]
            return zero                                        # padded tap -> zeros

        rows = []
        for r in range(ho):
            for c in range(wo):
                taps = [pix(2 * r + di - 1, 2 * c + dj - 1)
                        for di in range(3) for dj in range(3)]
                rows.append(jnp.concatenate(taps, axis=-1))    # [n, 9*C]
        return jnp.concatenate(rows, axis=0)                   # [ho*wo*n, 9*C]

    # ---- conv trunk: each layer is ONE GEMM + BatchNorm + LeakyReLU(0.2) ----
    a1 = conv_gemm(p1_ref[...], wc1_ref, g1_ref, b1_ref)       # [h1*w1*n, 32]
    h2, w2 = h_a1 // 2, w_a1 // 2
    a2 = conv_gemm(im2col(a1, h_a1, w_a1), wc2_ref, g2_ref, b2_ref)   # [h2*w2*n, 64]
    h3, w3 = h2 // 2, w2 // 2
    a3 = conv_gemm(im2col(a2, h2, w2), wc3_ref, g3_ref, b3_ref)       # [h3*w3*n, 128]

    # ---- dense head: NCHW-flatten + concat(y) folded into a lane-concat of the
    # contiguous [n, 128] spatial row-blocks of a3 (W1 was permuted once to match) ----
    feat_blocks = [a3[s * n:(s + 1) * n, :] for s in range(h3 * w3)]
    feat = jnp.concatenate(feat_blocks + [y_ref[...]], axis=-1)        # [n, 512 + ny]
    h = jnp.dot(feat, w1_ref[...], preferred_element_type=jnp.float32) + bl1_ref[...]

    # LayerNorm(256) over the feature (lane) axis, centered two-pass stats.
    mu = jnp.mean(h, axis=1, keepdims=True)
    var = jnp.mean((h - mu) * (h - mu), axis=1, keepdims=True)
    hn = (h - mu) * jax.lax.rsqrt(var + LN_EPS) * lng_ref[...] + lnb_ref[...]
    hn = lrelu(hn)

    # Final Linear 256 -> 1 as a VPU multiply + lane reduction (skip a 1-lane MXU pass).
    out = jnp.sum(hn * w2_ref[...], axis=1, keepdims=True) + bl2_ref[...]
    o_ref[...] = jax.nn.sigmoid(out)                                   # Sigmoid


# ----------------------- constant / weight preparation -----------------------

def _stack_conv_weight(w_torch):
    # PyTorch Conv2d layout [Co, Ci, kh, kw] -> stacked [(tap, Ci), Co] = [9*Ci, Co],
    # matching the (tap-major, channel-minor) lane order of the in-kernel patches.
    co, ci, kh, kw = w_torch.shape
    return jnp.transpose(w_torch, (2, 3, 1, 0)).reshape(kh * kw * ci, co)


def prepare_inputs(params, height, width):
    """Hoist all weight transposes / reshapes (done once, off the hot path)."""
    h4, w4 = height // 8, width // 8
    cf = params["w_c3"].shape[0]                 # final conv channels (128)
    spatial = h4 * w4                            # 2*2 = 4
    nflat = cf * spatial
    w_l1 = params["w_l1"]                        # [cf*spatial + n_cond, 256]
    # Fold the NCHW-flatten permutation into W1: kernel feature order is
    # (spatial s, channel c); PyTorch Flatten order is (channel c, spatial s).
    w1_conv = jnp.transpose(w_l1[:nflat].reshape(cf, spatial, -1), (1, 0, 2)
                            ).reshape(nflat, -1)
    w1 = jnp.concatenate([w1_conv, w_l1[nflat:]], axis=0)
    return dict(
        Wc1=_stack_conv_weight(params["w_c1"]),
        Wc2=_stack_conv_weight(params["w_c2"]),
        Wc3=_stack_conv_weight(params["w_c3"]),
        g1=params["g1"].reshape(1, -1), b1=params["b1"].reshape(1, -1),
        g2=params["g2"].reshape(1, -1), b2=params["b2"].reshape(1, -1),
        g3=params["g3"].reshape(1, -1), b3=params["b3"].reshape(1, -1),
        W1=w1,
        b_l1=params["b_l1"].reshape(1, -1),
        ln_g=params["ln_g"].reshape(1, -1),
        ln_b=params["ln_b"].reshape(1, -1),
        w_l2=params["w_l2"].reshape(1, -1),
        b_l2=params["b_l2"].reshape(1, 1),
    )


# --------------------------------- forward -----------------------------------

def _conv1_im2col(x_nchw):
    """k=3/s=2/p=1 im2col of the raw input, done with XLA strided slices in the
    wrapper (tiny tensor): [N,3,H,W] -> [Ho*Wo*N, 27] with rows ordered (r, c, n)."""
    nb, c, hh, ww = x_nchw.shape
    ho, wo = hh // 2, ww // 2
    x = jnp.transpose(x_nchw, (0, 2, 3, 1))                     # NHWC
    xp = jnp.pad(x, ((0, 0), (1, 1), (1, 1), (0, 0)))
    taps = [xp[:, di:di + 2 * ho:2, dj:dj + 2 * wo:2, :]
            for di in range(3) for dj in range(3)]
    patch = jnp.concatenate(taps, axis=-1)                      # [N, Ho, Wo, 27]
    patch = jnp.transpose(patch, (1, 2, 0, 3))                  # rows (r, c, n)
    return patch.reshape(ho * wo * nb, 9 * c)


def discriminator_forward(prep, x_nchw, y):
    nb, c, hh, ww = x_nchw.shape
    # Shape-consistency guards (weights were prepped for these dims).
    assert 9 * c == prep["Wc1"].shape[0], "input channels inconsistent with conv1 weight"
    assert (hh // 8) * (ww // 8) * prep["Wc3"].shape[1] + y.shape[1] == prep["W1"].shape[0], \
        "spatial size / condition dim inconsistent with the dense weights"

    patch1 = _conv1_im2col(x_nchw)
    kernel = functools.partial(discriminator_kernel, n=nb, h_a1=hh // 2, w_a1=ww // 2)
    return pl.pallas_call(
        kernel,
        out_shape=jax.ShapeDtypeStruct((nb, 1), jnp.float32),
        in_specs=[pl.BlockSpec(memory_space=pltpu.MemorySpace.VMEM)] * 17,
        out_specs=pl.BlockSpec(memory_space=pltpu.MemorySpace.VMEM),
    )(patch1, y,
      prep["Wc1"], prep["g1"], prep["b1"],
      prep["Wc2"], prep["g2"], prep["b2"],
      prep["Wc3"], prep["g3"], prep["b3"],
      prep["W1"], prep["b_l1"], prep["ln_g"], prep["ln_b"],
      prep["w_l2"], prep["b_l2"])


# --------------------------- pure-JAX reference -------------------------------

def reference_forward(params, x_nchw, y):
    def conv(x, w):
        return jax.lax.conv_general_dilated(
            x, jnp.transpose(w, (2, 3, 1, 0)), window_strides=(2, 2),
            padding=((1, 1), (1, 1)), dimension_numbers=("NHWC", "HWIO", "NHWC"))

    def bn(x, g, b):
        mean = jnp.mean(x, axis=(0, 1, 2), keepdims=True)
        var = jnp.mean((x - mean) ** 2, axis=(0, 1, 2), keepdims=True)
        return (x - mean) * jax.lax.rsqrt(var + BN_EPS) * g + b

    def lrelu(x):
        return jnp.where(x > 0, x, LRELU_SLOPE * x)

    x = jnp.transpose(x_nchw, (0, 2, 3, 1))
    x = lrelu(bn(conv(x, params["w_c1"]), params["g1"], params["b1"]))
    x = lrelu(bn(conv(x, params["w_c2"]), params["g2"], params["b2"]))
    x = lrelu(bn(conv(x, params["w_c3"]), params["g3"], params["b3"]))
    x = jnp.transpose(x, (0, 3, 1, 2)).reshape(x.shape[0], -1)        # NCHW Flatten
    feat = jnp.concatenate([x, y], axis=1)
    h = feat @ params["w_l1"] + params["b_l1"]
    mean = jnp.mean(h, axis=1, keepdims=True)
    var = jnp.mean((h - mean) ** 2, axis=1, keepdims=True)
    h = (h - mean) * jax.lax.rsqrt(var + LN_EPS) * params["ln_g"] + params["ln_b"]
    h = lrelu(h)
    return jax.nn.sigmoid(h @ params["w_l2"] + params["b_l2"])


# ----------------------------------- params -----------------------------------

def init_params(key):
    ks = jax.random.split(key, 8)
    f32 = jnp.float32
    return {
        "w_c1": 0.05 * jax.random.normal(ks[0], (32, 3, 3, 3), f32),
        "g1": jnp.ones((32,), f32), "b1": jnp.zeros((32,), f32),
        "w_c2": 0.05 * jax.random.normal(ks[1], (64, 32, 3, 3), f32),
        "g2": jnp.ones((64,), f32), "b2": jnp.zeros((64,), f32),
        "w_c3": 0.05 * jax.random.normal(ks[2], (128, 64, 3, 3), f32),
        "g3": jnp.ones((128,), f32), "b3": jnp.zeros((128,), f32),
        "w_l1": 0.05 * jax.random.normal(ks[3], (128 * 2 * 2 + 5, 256), f32),
        "b_l1": 0.05 * jax.random.normal(ks[4], (256,), f32),
        "ln_g": jnp.ones((256,), f32), "ln_b": jnp.zeros((256,), f32),
        "w_l2": 0.05 * jax.random.normal(ks[5], (256, 1), f32),
        "b_l2": 0.05 * jax.random.normal(ks[6], (1,), f32),
    }


if __name__ == "__main__":
    key = jax.random.PRNGKey(0)
    kx, ky, kp = jax.random.split(key, 3)
    # 16x16 input so the conv trunk ends at 128 x 2 x 2 (dense input = 128*2*2 + 5).
    x = jax.random.normal(kx, (2, 3, 16, 16), jnp.float32)
    y = jax.random.normal(ky, (2, 5), jnp.float32)
    params = init_params(kp)
    prep = prepare_inputs(params, height=16, width=16)            # hoisted, done once

    out = jax.jit(discriminator_forward)(prep, x, y)
    out = jax.block_until_ready(out)

    ref = reference_forward(params, x, y)
    assert out.shape == (2, 1)
    assert bool(jnp.all(jnp.isfinite(out)))
    assert bool(jnp.all((out >= 0) & (out <= 1)))
    assert bool(jnp.allclose(out, ref, atol=1e-3, rtol=1e-3))
    print("KERNEL_OK")
</pallas_src>

<mosaic_0001>
module attributes {stable_mosaic.version = 11 : i64} {
  func.func @discriminator_kernel(%arg0: memref<128x27xf32, #tpu.memory_space<vmem>>, %arg1: memref<2x5xf32, #tpu.memory_space<vmem>>, %arg2: memref<27x32xf32, #tpu.memory_space<vmem>>, %arg3: memref<1x32xf32, #tpu.memory_space<vmem>>, %arg4: memref<1x32xf32, #tpu.memory_space<vmem>>, %arg5: memref<288x64xf32, #tpu.memory_space<vmem>>, %arg6: memref<1x64xf32, #tpu.memory_space<vmem>>, %arg7: memref<1x64xf32, #tpu.memory_space<vmem>>, %arg8: memref<576x128xf32, #tpu.memory_space<vmem>>, %arg9: memref<1x128xf32, #tpu.memory_space<vmem>>, %arg10: memref<1x128xf32, #tpu.memory_space<vmem>>, %arg11: memref<517x256xf32, #tpu.memory_space<vmem>>, %arg12: memref<1x256xf32, #tpu.memory_space<vmem>>, %arg13: memref<1x256xf32, #tpu.memory_space<vmem>>, %arg14: memref<1x256xf32, #tpu.memory_space<vmem>>, %arg15: memref<1x256xf32, #tpu.memory_space<vmem>>, %arg16: memref<1x1xf32, #tpu.memory_space<vmem>>, %arg17: memref<2x1xf32, #tpu.memory_space<vmem>>) attributes {dimension_semantics = [], scalar_prefetch = 0 : i64, scratch_operands = 0 : i64, tpu.core_type = #tpu.core_type<tc>} {
    %c0 = arith.constant 0 : index
    %c0_0 = arith.constant 0 : index
    %0 = vector.load %arg0[%c0, %c0_0] : memref<128x27xf32, #tpu.memory_space<vmem>>, vector<128x27xf32>
    %c0_1 = arith.constant 0 : index
    %c0_2 = arith.constant 0 : index
    %1 = vector.load %arg2[%c0_1, %c0_2] : memref<27x32xf32, #tpu.memory_space<vmem>>, vector<27x32xf32>
    %cst = arith.constant dense<0.000000e+00> : vector<128x32xf32>
    %2 = tpu.matmul %0, %1, %cst {dimension_numbers = #tpu.dot_dimension_numbers<[1], [0], [0], [1], [0, 0, 1, 1], [], []>} : vector<128x27xf32>, vector<27x32xf32>, vector<128x32xf32> -> vector<128x32xf32>
    %cst_3 = arith.constant dense<0.000000e+00> : vector<32xf32>
    %3 = vector.multi_reduction <add>, %2, %cst_3 [0] : vector<128x32xf32> to vector<32xf32>
    %4 = vector.shape_cast %3 : vector<32xf32> to vector<1x32xf32>
    %cst_4 = arith.constant 1.280000e+02 : f32
    %5 = vector.broadcast %cst_4 : f32 to vector<1x32xf32>
    %6 = arith.divf %4, %5 : vector<1x32xf32>
    %7 = vector.broadcast %6 : vector<1x32xf32> to vector<128x32xf32>
    %8 = arith.subf %2, %7 : vector<128x32xf32>
    %9 = vector.broadcast %6 : vector<1x32xf32> to vector<128x32xf32>
    %10 = arith.subf %2, %9 : vector<128x32xf32>
    %11 = arith.mulf %8, %10 : vector<128x32xf32>
    %cst_5 = arith.constant dense<0.000000e+00> : vector<32xf32>
    %12 = vector.multi_reduction <add>, %11, %cst_5 [0] : vector<128x32xf32> to vector<32xf32>
    %13 = vector.shape_cast %12 : vector<32xf32> to vector<1x32xf32>
    %cst_6 = arith.constant 1.280000e+02 : f32
    %14 = vector.broadcast %cst_6 : f32 to vector<1x32xf32>
    %15 = arith.divf %13, %14 : vector<1x32xf32>
    %16 = vector.broadcast %6 : vector<1x32xf32> to vector<128x32xf32>
    %17 = arith.subf %2, %16 : vector<128x32xf32>
    %cst_7 = arith.constant 9.99999974E-6 : f32
    %18 = vector.broadcast %cst_7 : f32 to vector<1x32xf32>
    %19 = arith.addf %15, %18 : vector<1x32xf32>
    %20 = math.rsqrt %19 : vector<1x32xf32>
    %21 = vector.broadcast %20 : vector<1x32xf32> to vector<128x32xf32>
    %22 = arith.mulf %17, %21 : vector<128x32xf32>
    %c0_8 = arith.constant 0 : index
    %c0_9 = arith.constant 0 : index
    %23 = vector.load %arg3[%c0_8, %c0_9] : memref<1x32xf32, #tpu.memory_space<vmem>>, vector<1x32xf32>
    %24 = vector.broadcast %23 : vector<1x32xf32> to vector<128x32xf32>
    %25 = arith.mulf %22, %24 : vector<128x32xf32>
    %c0_10 = arith.constant 0 : index
    %c0_11 = arith.constant 0 : index
    %26 = vector.load %arg4[%c0_10, %c0_11] : memref<1x32xf32, #tpu.memory_space<vmem>>, vector<1x32xf32>
    %27 = vector.broadcast %26 : vector<1x32xf32> to vector<128x32xf32>
    %28 = arith.addf %25, %27 : vector<128x32xf32>
    %cst_12 = arith.constant 0.000000e+00 : f32
    %29 = vector.broadcast %cst_12 : f32 to vector<128x32xf32>
    %30 = arith.cmpf ogt, %28, %29 : vector<128x32xf32>
    %cst_13 = arith.constant 2.000000e-01 : f32
    %31 = vector.broadcast %cst_13 : f32 to vector<128x32xf32>
    %32 = arith.mulf %31, %28 : vector<128x32xf32>
    %33 = arith.select %30, %28, %32 : vector<128x32xi1>, vector<128x32xf32>
    %cst_14 = arith.constant 0.000000e+00 : f32
    %34 = vector.broadcast %cst_14 : f32 to vector<2x32xf32>
    %35 = vector.extract_strided_slice %33 {offsets = [0, 0], sizes = [2, 32], strides = [1, 1]} : vector<128x32xf32> to vector<2x32xf32>
    %36 = vector.extract_strided_slice %33 {offsets = [2, 0], sizes = [2, 32], strides = [1, 1]} : vector<128x32xf32> to vector<2x32xf32>
    %37 = vector.extract_strided_slice %33 {offsets = [16, 0], sizes = [2, 32], strides = [1, 1]} : vector<128x32xf32> to vector<2x32xf32>
    %38 = vector.extract_strided_slice %33 {offsets = [18, 0], sizes = [2, 32], strides = [1, 1]} : vector<128x32xf32> to vector<2x32xf32>
    %39 = tpu.concatenate %34, %34, %34, %34, %35, %36, %34, %37, %38 in 1 : vector<2x32xf32>, vector<2x32xf32>, vector<2x32xf32>, vector<2x32xf32>, vector<2x32xf32>, vector<2x32xf32>, vector<2x32xf32>, vector<2x32xf32>, vector<2x32xf32> -> vector<2x288xf32>
    %40 = vector.extract_strided_slice %33 {offsets = [2, 0], sizes = [2, 32], strides = [1, 1]} : vector<128x32xf32> to vector<2x32xf32>
    %41 = vector.extract_strided_slice %33 {offsets = [4, 0], sizes = [2, 32], strides = [1, 1]} : vector<128x32xf32> to vector<2x32xf32>
    %42 = vector.extract_strided_slice %33 {offsets = [6, 0], sizes = [2, 32], strides = [1, 1]} : vector<128x32xf32> to vector<2x32xf32>
    %43 = vector.extract_strided_slice %33 {offsets = [18, 0], sizes = [2, 32], strides = [1, 1]} : vector<128x32xf32> to vector<2x32xf32>
    %44 = vector.extract_strided_slice %33 {offsets = [20, 0], sizes = [2, 32], strides = [1, 1]} : vector<128x32xf32> to vector<2x32xf32>
    %45 = vector.extract_strided_slice %33 {offsets = [22, 0], sizes = [2, 32], strides = [1, 1]} : vector<128x32xf32> to vector<2x32xf32>
    %46 = tpu.concatenate %34, %34, %34, %40, %41, %42, %43, %44, %45 in 1 : vector<2x32xf32>, vector<2x32xf32>, vector<2x32xf32>, vector<2x32xf32>, vector<2x32xf32>, vector<2x32xf32>, vector<2x32xf32>, vector<2x32xf32>, vector<2x32xf32> -> vector<2x288xf32>
    %47 = vector.extract_strided_slice %33 {offsets = [6, 0], sizes = [2, 32], strides = [1, 1]} : vector<128x32xf32> to vector<2x32xf32>
    %48 = vector.extract_strided_slice %33 {offsets = [8, 0], sizes = [2, 32], strides = [1, 1]} : vector<128x32xf32> to vector<2x32xf32>
    %49 = vector.extract_strided_slice %33 {offsets = [10, 0], sizes = [2, 32], strides = [1, 1]} : vector<128x32xf32> to vector<2x32xf32>
    %50 = vector.extract_strided_slice %33 {offsets = [22, 0], sizes = [2, 32], strides = [1, 1]} : vector<128x32xf32> to vector<2x32xf32>
    %51 = vector.extract_strided_slice %33 {offsets = [24, 0], sizes = [2, 32], strides = [1, 1]} : vector<128x32xf32> to vector<2x32xf32>
    %52 = vector.extract_strided_slice %33 {offsets = [26, 0], sizes = [2, 32], strides = [1, 1]} : vector<128x32xf32> to vector<2x32xf32>
    %53 = tpu.concatenate %34, %34, %34, %47, %48, %49, %50, %51, %52 in 1 : vector<2x32xf32>, vector<2x32xf32>, vector<2x32xf32>, vector<2x32xf32>, vector<2x32xf32>, vector<2x32xf32>, vector<2x32xf32>, vector<2x32xf32>, vector<2x32xf32> -> vector<2x288xf32>
    %54 = vector.extract_strided_slice %33 {offsets = [10, 0], sizes = [2, 32], strides = [1, 1]} : vector<128x32xf32> to vector<2x32xf32>
    %55 = vector.extract_strided_slice %33 {offsets = [12, 0], sizes = [2, 32], strides = [1, 1]} : vector<128x32xf32> to vector<2x32xf32>
    %56 = vector.extract_strided_slice %33 {offsets = [14, 0], sizes = [2, 32], strides = [1, 1]} : vector<128x32xf32> to vector<2x32xf32>
    %57 = vector.extract_strided_slice %33 {offsets = [26, 0], sizes = [2, 32], strides = [1, 1]} : vector<128x32xf32> to vector<2x32xf32>
    %58 = vector.extract_strided_slice %33 {offsets = [28, 0], sizes = [2, 32], strides = [1, 1]} : vector<128x32xf32> to vector<2x32xf32>
    %59 = vector.extract_strided_slice %33 {offsets = [30, 0], sizes = [2, 32], strides = [1, 1]} : vector<128x32xf32> to vector<2x32xf32>
    %60 = tpu.concatenate %34, %34, %34, %54, %55, %56, %57, %58, %59 in 1 : vector<2x32xf32>, vector<2x32xf32>, vector<2x32xf32>, vector<2x32xf32>, vector<2x32xf32>, vector<2x32xf32>, vector<2x32xf32>, vector<2x32xf32>, vector<2x32xf32> -> vector<2x288xf32>
    %61 = vector.extract_strided_slice %33 {offsets = [16, 0], sizes = [2, 32], strides = [1, 1]} : vector<128x32xf32> to vector<2x32xf32>
    %62 = vector.extract_strided_slice %33 {offsets = [18, 0], sizes = [2, 32], strides = [1, 1]} : vector<128x32xf32> to vector<2x32xf32>
    %63 = vector.extract_strided_slice %33 {offsets = [32, 0], sizes = [2, 32], strides = [1, 1]} : vector<128x32xf32> to vector<2x32xf32>
    %64 = vector.extract_strided_slice %33 {offsets = [34, 0], sizes = [2, 32], strides = [1, 1]} : vector<128x32xf32> to vector<2x32xf32>
    %65 = vector.extract_strided_slice %33 {offsets = [48, 0], sizes = [2, 32], strides = [1, 1]} : vector<128x32xf32> to vector<2x32xf32>
    %66 = vector.extract_strided_slice %33 {offsets = [50, 0], sizes = [2, 32], strides = [1, 1]} : vector<128x32xf32> to vector<2x32xf32>
    %67 = tpu.concatenate %34, %61, %62, %34, %63, %64, %34, %65, %66 in 1 : vector<2x32xf32>, vector<2x32xf32>, vector<2x32xf32>, vector<2x32xf32>, vector<2x32xf32>, vector<2x32xf32>, vector<2x32xf32>, vector<2x32xf32>, vector<2x32xf32> -> vector<2x288xf32>
    %68 = vector.extract_strided_slice %33 {offsets = [18, 0], sizes = [2, 32], strides = [1, 1]} : vector<128x32xf32> to vector<2x32xf32>
    %69 = vector.extract_strided_slice %33 {offsets = [20, 0], sizes = [2, 32], strides = [1, 1]} : vector<128x32xf32> to vector<2x32xf32>
    %70 = vector.extract_strided_slice %33 {offsets = [22, 0], sizes = [2, 32], strides = [1, 1]} : vector<128x32xf32> to vector<2x32xf32>
    %71 = vector.extract_strided_slice %33 {offsets = [34, 0], sizes = [2, 32], strides = [1, 1]} : vector<128x32xf32> to vector<2x32xf32>
    %72 = vector.extract_strided_slice %33 {offsets = [36, 0], sizes = [2, 32], strides = [1, 1]} : vector<128x32xf32> to vector<2x32xf32>
    %73 = vector.extract_strided_slice %33 {offsets = [38, 0], sizes = [2, 32], strides = [1, 1]} : vector<128x32xf32> to vector<2x32xf32>
    %74 = vector.extract_strided_slice %33 {offsets = [50, 0], sizes = [2, 32], strides = [1, 1]} : vector<128x32xf32> to vector<2x32xf32>
    %75 = vector.extract_strided_slice %33 {offsets = [52, 0], sizes = [2, 32], strides = [1, 1]} : vector<128x32xf32> to vector<2x32xf32>
    %76 = vector.extract_strided_slice %33 {offsets = [54, 0], sizes = [2, 32], strides = [1, 1]} : vector<128x32xf32> to vector<2x32xf32>
    %77 = tpu.concatenate %68, %69, %70, %71, %72, %73, %74, %75, %76 in 1 : vector<2x32xf32>, vector<2x32xf32>, vector<2x32xf32>, vector<2x32xf32>, vector<2x32xf32>, vector<2x32xf32>, vector<2x32xf32>, vector<2x32xf32>, vector<2x32xf32> -> vector<2x288xf32>
    %78 = vector.extract_strided_slice %33 {offsets = [22, 0], sizes = [2, 32], strides = [1, 1]} : vector<128x32xf32> to vector<2x32xf32>
    %79 = vector.extract_strided_slice %33 {offsets = [24, 0], sizes = [2, 32], strides = [1, 1]} : vector<128x32xf32> to vector<2x32xf32>
    %80 = vector.extract_strided_slice %33 {offsets = [26, 0], sizes = [2, 32], strides = [1, 1]} : vector<128x32xf32> to vector<2x32xf32>
    %81 = vector.extract_strided_slice %33 {offsets = [38, 0], sizes = [2, 32], strides = [1, 1]} : vector<128x32xf32> to vector<2x32xf32>
    %82 = vector.extract_strided_slice %33 {offsets = [40, 0], sizes = [2, 32], strides = [1, 1]} : vector<128x32xf32> to vector<2x32xf32>
    %83 = vector.extract_strided_slice %33 {offsets = [42, 0], sizes = [2, 32], strides = [1, 1]} : vector<128x32xf32> to vector<2x32xf32>
    %84 = vector.extract_strided_slice %33 {offsets = [54, 0], sizes = [2, 32], strides = [1, 1]} : vector<128x32xf32> to vector<2x32xf32>
    %85 = vector.extract_strided_slice %33 {offsets = [56, 0], sizes = [2, 32], strides = [1, 1]} : vector<128x32xf32> to vector<2x32xf32>
    %86 = vector.extract_strided_slice %33 {offsets = [58, 0], sizes = [2, 32], strides = [1, 1]} : vector<128x32xf32> to vector<2x32xf32>
    %87 = tpu.concatenate %78, %79, %80, %81, %82, %83, %84, %85, %86 in 1 : vector<2x32xf32>, vector<2x32xf32>, vector<2x32xf32>, vector<2x32xf32>, vector<2x32xf32>, vector<2x32xf32>, vector<2x32xf32>, vector<2x32xf32>, vector<2x32xf32> -> vector<2x288xf32>
    %88 = vector.extract_strided_slice %33 {offsets = [26, 0], sizes = [2, 32], strides = [1, 1]} : vector<128x32xf32> to vector<2x32xf32>
    %89 = vector.extract_strided_slice %33 {offsets = [28, 0], sizes = [2, 32], strides = [1, 1]} : vector<128x32xf32> to vector<2x32xf32>
    %90 = vector.extract_strided_slice %33 {offsets = [30, 0], sizes = [2, 32], strides = [1, 1]} : vector<128x32xf32> to vector<2x32xf32>
    %91 = vector.extract_strided_slice %33 {offsets = [42, 0], sizes = [2, 32], strides = [1, 1]} : vector<128x32xf32> to vector<2x32xf32>
    %92 = vector.extract_strided_slice %33 {offsets = [44, 0], sizes = [2, 32], strides = [1, 1]} : vector<128x32xf32> to vector<2x32xf32>
    %93 = vector.extract_strided_slice %33 {offsets = [46, 0], sizes = [2, 32], strides = [1, 1]} : vector<128x32xf32> to vector<2x32xf32>
    %94 = vector.extract_strided_slice %33 {offsets = [58, 0], sizes = [2, 32], strides = [1, 1]} : vector<128x32xf32> to vector<2x32xf32>
    %95 = vector.extract_strided_slice %33 {offsets = [60, 0], sizes = [2, 32], strides = [1, 1]} : vector<128x32xf32> to vector<2x32xf32>
    %96 = vector.extract_strided_slice %33 {offsets = [62, 0], sizes = [2, 32], strides = [1, 1]} : vector<128x32xf32> to vector<2x32xf32>
    %97 = tpu.concatenate %88, %89, %90, %91, %92, %93, %94, %95, %96 in 1 : vector<2x32xf32>, vector<2x32xf32>, vector<2x32xf32>, vector<2x32xf32>, vector<2x32xf32>, vector<2x32xf32>, vector<2x32xf32>, vector<2x32xf32>, vector<2x32xf32> -> vector<2x288xf32>
    %98 = vector.extract_strided_slice %33 {offsets = [48, 0], sizes = [2, 32], strides = [1, 1]} : vector<128x32xf32> to vector<2x32xf32>
    %99 = vector.extract_strided_slice %33 {offsets = [50, 0], sizes = [2, 32], strides = [1, 1]} : vector<128x32xf32> to vector<2x32xf32>
    %100 = vector.extract_strided_slice %33 {offsets = [64, 0], sizes = [2, 32], strides = [1, 1]} : vector<128x32xf32> to vector<2x32xf32>
    %101 = vector.extract_strided_slice %33 {offsets = [66, 0], sizes = [2, 32], strides = [1, 1]} : vector<128x32xf32> to vector<2x32xf32>
    %102 = vector.extract_strided_slice %33 {offsets = [80, 0], sizes = [2, 32], strides = [1, 1]} : vector<128x32xf32> to vector<2x32xf32>
    %103 = vector.extract_strided_slice %33 {offsets = [82, 0], sizes = [2, 32], strides = [1, 1]} : vector<128x32xf32> to vector<2x32xf32>
    %104 = tpu.concatenate %34, %98, %99, %34, %100, %101, %34, %102, %103 in 1 : vector<2x32xf32>, vector<2x32xf32>, vector<2x32xf32>, vector<2x32xf32>, vector<2x32xf32>, vector<2x32xf32>, vector<2x32xf32>, vector<2x32xf32>, vector<2x32xf32> -> vector<2x288xf32>
    %105 = vector.extract_strided_slice %33 {offsets = [50, 0], sizes = [2, 32], strides = [1, 1]} : vector<128x32xf32> to vector<2x32xf32>
    %106 = vector.extract_strided_slice %33 {offsets = [52, 0], sizes = [2, 32], strides = [1, 1]} : vector<128x32xf32> to vector<2x32xf32>
    %107 = vector.extract_strided_slice %33 {offsets = [54, 0], sizes = [2, 32], strides = [1, 1]} : vector<128x32xf32> to vector<2x32xf32>
    %108 = vector.extract_strided_slice %33 {offsets = [66, 0], sizes = [2, 32], strides = [1, 1]} : vector<128x32xf32> to vector<2x32xf32>
    %109 = vector.extract_strided_slice %33 {offsets = [68, 0], sizes = [2, 32], strides = [1, 1]} : vector<128x32xf32> to vector<2x32xf32>
    %110 = vector.extract_strided_slice %33 {offsets = [70, 0], sizes = [2, 32], strides = [1, 1]} : vector<128x32xf32> to vector<2x32xf32>
    %111 = vector.extract_strided_slice %33 {offsets = [82, 0], sizes = [2, 32], strides = [1, 1]} : vector<128x32xf32> to vector<2x32xf32>
    %112 = vector.extract_strided_slice %33 {offsets = [84, 0], sizes = [2, 32], strides = [1, 1]} : vector<128x32xf32> to vector<2x32xf32>
    %113 = vector.extract_strided_slice %33 {offsets = [86, 0], sizes = [2, 32], strides = [1, 1]} : vector<128x32xf32> to vector<2x32xf32>
    %114 = tpu.concatenate %105, %106, %107, %108, %109, %110, %111, %112, %113 in 1 : vector<2x32xf32>, vector<2x32xf32>, vector<2x32xf32>, vector<2x32xf32>, vector<2x32xf32>, vector<2x32xf32>, vector<2x32xf32>, vector<2x32xf32>, vector<2x32xf32> -> vector<2x288xf32>
    %115 = vector.extract_strided_slice %33 {offsets = [54, 0], sizes = [2, 32], strides = [1, 1]} : vector<128x32xf32> to vector<2x32xf32>
    %116 = vector.extract_strided_slice %33 {offsets = [56, 0], sizes = [2, 32], strides = [1, 1]} : vector<128x32xf32> to vector<2x32xf32>
    %117 = vector.extract_strided_slice %33 {offsets = [58, 0], sizes = [2, 32], strides = [1, 1]} : vector<128x32xf32> to vector<2x32xf32>
    %118 = vector.extract_strided_slice %33 {offsets = [70, 0], sizes = [2, 32], strides = [1, 1]} : vector<128x32xf32> to vector<2x32xf32>
    %119 = vector.extract_strided_slice %33 {offsets = [72, 0], sizes = [2, 32], strides = [1, 1]} : vector<128x32xf32> to vector<2x32xf32>
    %120 = vector.extract_strided_slice %33 {offsets = [74, 0], sizes = [2, 32], strides = [1, 1]} : vector<128x32xf32> to vector<2x32xf32>
    %121 = vector.extract_strided_slice %33 {offsets = [86, 0], sizes = [2, 32], strides = [1, 1]} : vector<128x32xf32> to vector<2x32xf32>
    %122 = vector.extract_strided_slice %33 {offsets = [88, 0], sizes = [2, 32], strides = [1, 1]} : vector<128x32xf32> to vector<2x32xf32>
    %123 = vector.extract_strided_slice %33 {offsets = [90, 0], sizes = [2, 32], strides = [1, 1]} : vector<128x32xf32> to vector<2x32xf32>
    %124 = tpu.concatenate %115, %116, %117, %118, %119, %120, %121, %122, %123 in 1 : vector<2x32xf32>, vector<2x32xf32>, vector<2x32xf32>, vector<2x32xf32>, vector<2x32xf32>, vector<2x32xf32>, vector<2x32xf32>, vector<2x32xf32>, vector<2x32xf32> -> vector<2x288xf32>
    %125 = vector.extract_strided_slice %33 {offsets = [58, 0], sizes = [2, 32], strides = [1, 1]} : vector<128x32xf32> to vector<2x32xf32>
    %126 = vector.extract_strided_slice %33 {offsets = [60, 0], sizes = [2, 32], strides = [1, 1]} : vector<128x32xf32> to vector<2x32xf32>
    %127 = vector.extract_strided_slice %33 {offsets = [62, 0], sizes = [2, 32], strides = [1, 1]} : vector<128x32xf32> to vector<2x32xf32>
    %128 = vector.extract_strided_slice %33 {offsets = [74, 0], sizes = [2, 32], strides = [1, 1]} : vector<128x32xf32> to vector<2x32xf32>
    %129 = vector.extract_strided_slice %33 {offsets = [76, 0], sizes = [2, 32], strides = [1, 1]} : vector<128x32xf32> to vector<2x32xf32>
    %130 = vector.extract_strided_slice %33 {offsets = [78, 0], sizes = [2, 32], strides = [1, 1]} : vector<128x32xf32> to vector<2x32xf32>
    %131 = vector.extract_strided_slice %33 {offsets = [90, 0], sizes = [2, 32], strides = [1, 1]} : vector<128x32xf32> to vector<2x32xf32>
    %132 = vector.extract_strided_slice %33 {offsets = [92, 0], sizes = [2, 32], strides = [1, 1]} : vector<128x32xf32> to vector<2x32xf32>
    %133 = vector.extract_strided_slice %33 {offsets = [94, 0], sizes = [2, 32], strides = [1, 1]} : vector<128x32xf32> to vector<2x32xf32>
    %134 = tpu.concatenate %125, %126, %127, %128, %129, %130, %131, %132, %133 in 1 : vector<2x32xf32>, vector<2x32xf32>, vector<2x32xf32>, vector<2x32xf32>, vector<2x32xf32>, vector<2x32xf32>, vector<2x32xf32>, vector<2x32xf32>, vector<2x32xf32> -> vector<2x288xf32>
    %135 = vector.extract_strided_slice %33 {offsets = [80, 0], sizes = [2, 32], strides = [1, 1]} : vector<128x32xf32> to vector<2x32xf32>
    %136 = vector.extract_strided_slice %33 {offsets = [82, 0], sizes = [2, 32], strides = [1, 1]} : vector<128x32xf32> to vector<2x32xf32>
    %137 = vector.extract_strided_slice %33 {offsets = [96, 0], sizes = [2, 32], strides = [1, 1]} : vector<128x32xf32> to vector<2x32xf32>
    %138 = vector.extract_strided_slice %33 {offsets = [98, 0], sizes = [2, 32], strides = [1, 1]} : vector<128x32xf32> to vector<2x32xf32>
    %139 = vector.extract_strided_slice %33 {offsets = [112, 0], sizes = [2, 32], strides = [1, 1]} : vector<128x32xf32> to vector<2x32xf32>
    %140 = vector.extract_strided_slice %33 {offsets = [114, 0], sizes = [2, 32], strides = [1, 1]} : vector<128x32xf32> to vector<2x32xf32>
    %141 = tpu.concatenate %34, %135, %136, %34, %137, %138, %34, %139, %140 in 1 : vector<2x32xf32>, vector<2x32xf32>, vector<2x32xf32>, vector<2x32xf32>, vector<2x32xf32>, vector<2x32xf32>, vector<2x32xf32>, vector<2x32xf32>, vector<2x32xf32> -> vector<2x288xf32>
    %142 = vector.extract_strided_slice %33 {offsets = [82, 0], sizes = [2, 32], strides = [1, 1]} : vector<128x32xf32> to vector<2x32xf32>
    %143 = vector.extract_strided_slice %33 {offsets = [84, 0], sizes = [2, 32], strides = [1, 1]} : vector<128x32xf32> to vector<2x32xf32>
    %144 = vector.extract_strided_slice %33 {offsets = [86, 0], sizes = [2, 32], strides = [1, 1]} : vector<128x32xf32> to vector<2x32xf32>
    %145 = vector.extract_strided_slice %33 {offsets = [98, 0], sizes = [2, 32], strides = [1, 1]} : vector<128x32xf32> to vector<2x32xf32>
    %146 = vector.extract_strided_slice %33 {offsets = [100, 0], sizes = [2, 32], strides = [1, 1]} : vector<128x32xf32> to vector<2x32xf32>
    %147 = vector.extract_strided_slice %33 {offsets = [102, 0], sizes = [2, 32], strides = [1, 1]} : vector<128x32xf32> to vector<2x32xf32>
    %148 = vector.extract_strided_slice %33 {offsets = [114, 0], sizes = [2, 32], strides = [1, 1]} : vector<128x32xf32> to vector<2x32xf32>
    %149 = vector.extract_strided_slice %33 {offsets = [116, 0], sizes = [2, 32], strides = [1, 1]} : vector<128x32xf32> to vector<2x32xf32>
    %150 = vector.extract_strided_slice %33 {offsets = [118, 0], sizes = [2, 32], strides = [1, 1]} : vector<128x32xf32> to vector<2x32xf32>
    %151 = tpu.concatenate %142, %143, %144, %145, %146, %147, %148, %149, %150 in 1 : vector<2x32xf32>, vector<2x32xf32>, vector<2x32xf32>, vector<2x32xf32>, vector<2x32xf32>, vector<2x32xf32>, vector<2x32xf32>, vector<2x32xf32>, vector<2x32xf32> -> vector<2x288xf32>
    %152 = vector.extract_strided_slice %33 {offsets = [86, 0], sizes = [2, 32], strides = [1, 1]} : vector<128x32xf32> to vector<2x32xf32>
    %153 = vector.extract_strided_slice %33 {offsets = [88, 0], sizes = [2, 32], strides = [1, 1]} : vector<128x32xf32> to vector<2x32xf32>
    %154 = vector.extract_strided_slice %33 {offsets = [90, 0], sizes = [2, 32], strides = [1, 1]} : vector<128x32xf32> to vector<2x32xf32>
    %155 = vector.extract_strided_slice %33 {offsets = [102, 0], sizes = [2, 32], strides = [1, 1]} : vector<128x32xf32> to vector<2x32xf32>
    %156 = vector.extract_strided_slice %33 {offsets = [104, 0], sizes = [2, 32], strides = [1, 1]} : vector<128x32xf32> to vector<2x32xf32>
    %157 = vector.extract_strided_slice %33 {offsets = [106, 0], sizes = [2, 32], strides = [1, 1]} : vector<128x32xf32> to vector<2x32xf32>
    %158 = vector.extract_strided_slice %33 {offsets = [118, 0], sizes = [2, 32], strides = [1, 1]} : vector<128x32xf32> to vector<2x32xf32>
    %159 = vector.extract_strided_slice %33 {offsets = [120, 0], sizes = [2, 32], strides = [1, 1]} : vector<128x32xf32> to vector<2x32xf32>
    %160 = vector.extract_strided_slice %33 {offsets = [122, 0], sizes = [2, 32], strides = [1, 1]} : vector<128x32xf32> to vector<2x32xf32>
    %161 = tpu.concatenate %152, %153, %154, %155, %156, %157, %158, %159, %160 in 1 : vector<2x32xf32>, vector<2x32xf32>, vector<2x32xf32>, vector<2x32xf32>, vector<2x32xf32>, vector<2x32xf32>, vector<2x32xf32>, vector<2x32xf32>, vector<2x32xf32> -> vector<2x288xf32>
    %162 = vector.extract_strided_slice %33 {offsets = [90, 0], sizes = [2, 32], strides = [1, 1]} : vector<128x32xf32> to vector<2x32xf32>
    %163 = vector.extract_strided_slice %33 {offsets = [92, 0], sizes = [2, 32], strides = [1, 1]} : vector<128x32xf32> to vector<2x32xf32>
    %164 = vector.extract_strided_slice %33 {offsets = [94, 0], sizes = [2, 32], strides = [1, 1]} : vector<128x32xf32> to vector<2x32xf32>
    %165 = vector.extract_strided_slice %33 {offsets = [106, 0], sizes = [2, 32], strides = [1, 1]} : vector<128x32xf32> to vector<2x32xf32>
    %166 = vector.extract_strided_slice %33 {offsets = [108, 0], sizes = [2, 32], strides = [1, 1]} : vector<128x32xf32> to vector<2x32xf32>
    %167 = vector.extract_strided_slice %33 {offsets = [110, 0], sizes = [2, 32], strides = [1, 1]} : vector<128x32xf32> to vector<2x32xf32>
    %168 = vector.extract_strided_slice %33 {offsets = [122, 0], sizes = [2, 32], strides = [1, 1]} : vector<128x32xf32> to vector<2x32xf32>
    %169 = vector.extract_strided_slice %33 {offsets = [124, 0], sizes = [2, 32], strides = [1, 1]} : vector<128x32xf32> to vector<2x32xf32>
    %170 = vector.extract_strided_slice %33 {offsets = [126, 0], sizes = [2, 32], strides = [1, 1]} : vector<128x32xf32> to vector<2x32xf32>
    %171 = tpu.concatenate %162, %163, %164, %165, %166, %167, %168, %169, %170 in 1 : vector<2x32xf32>, vector<2x32xf32>, vector<2x32xf32>, vector<2x32xf32>, vector<2x32xf32>, vector<2x32xf32>, vector<2x32xf32>, vector<2x32xf32>, vector<2x32xf32> -> vector<2x288xf32>
    %172 = tpu.concatenate %39, %46, %53, %60, %67, %77, %87, %97, %104, %114, %124, %134, %141, %151, %161, %171 in 0 : vector<2x288xf32>, vector<2x288xf32>, vector<2x288xf32>, vector<2x288xf32>, vector<2x288xf32>, vector<2x288xf32>, vector<2x288xf32>, vector<2x288xf32>, vector<2x288xf32>, vector<2x288xf32>, vector<2x288xf32>, vector<2x288xf32>, vector<2x288xf32>, vector<2x288xf32>, vector<2x288xf32>, vector<2x288xf32> -> vector<32x288xf32>
    %c0_15 = arith.constant 0 : index
    %c0_16 = arith.constant 0 : index
    %173 = vector.load %arg5[%c0_15, %c0_16] : memref<288x64xf32, #tpu.memory_space<vmem>>, vector<288x64xf32>
    %cst_17 = arith.constant dense<0.000000e+00> : vector<32x64xf32>
    %174 = tpu.matmul %172, %173, %cst_17 {dimension_numbers = #tpu.dot_dimension_numbers<[1], [0], [0], [1], [0, 0, 1, 1], [], []>} : vector<32x288xf32>, vector<288x64xf32>, vector<32x64xf32> -> vector<32x64xf32>
    %cst_18 = arith.constant dense<0.000000e+00> : vector<64xf32>
    %175 = vector.multi_reduction <add>, %174, %cst_18 [0] : vector<32x64xf32> to vector<64xf32>
    %176 = vector.shape_cast %175 : vector<64xf32> to vector<1x64xf32>
    %cst_19 = arith.constant 3.200000e+01 : f32
    %177 = vector.broadcast %cst_19 : f32 to vector<1x64xf32>
    %178 = arith.divf %176, %177 : vector<1x64xf32>
    %179 = vector.broadcast %178 : vector<1x64xf32> to vector<32x64xf32>
    %180 = arith.subf %174, %179 : vector<32x64xf32>
    %181 = vector.broadcast %178 : vector<1x64xf32> to vector<32x64xf32>
    %182 = arith.subf %174, %181 : vector<32x64xf32>
    %183 = arith.mulf %180, %182 : vector<32x64xf32>
    %cst_20 = arith.constant dense<0.000000e+00> : vector<64xf32>
    %184 = vector.multi_reduction <add>, %183, %cst_20 [0] : vector<32x64xf32> to vector<64xf32>
    %185 = vector.shape_cast %184 : vector<64xf32> to vector<1x64xf32>
    %cst_21 = arith.constant 3.200000e+01 : f32
    %186 = vector.broadcast %cst_21 : f32 to vector<1x64xf32>
    %187 = arith.divf %185, %186 : vector<1x64xf32>
    %188 = vector.broadcast %178 : vector<1x64xf32> to vector<32x64xf32>
    %189 = arith.subf %174, %188 : vector<32x64xf32>
    %cst_22 = arith.constant 9.99999974E-6 : f32
    %190 = vector.broadcast %cst_22 : f32 to vector<1x64xf32>
    %191 = arith.addf %187, %190 : vector<1x64xf32>
    %192 = math.rsqrt %191 : vector<1x64xf32>
    %193 = vector.broadcast %192 : vector<1x64xf32> to vector<32x64xf32>
    %194 = arith.mulf %189, %193 : vector<32x64xf32>
    %c0_23 = arith.constant 0 : index
    %c0_24 = arith.constant 0 : index
    %195 = vector.load %arg6[%c0_23, %c0_24] : memref<1x64xf32, #tpu.memory_space<vmem>>, vector<1x64xf32>
    %196 = vector.broadcast %195 : vector<1x64xf32> to vector<32x64xf32>
    %197 = arith.mulf %194, %196 : vector<32x64xf32>
    %c0_25 = arith.constant 0 : index
    %c0_26 = arith.constant 0 : index
    %198 = vector.load %arg7[%c0_25, %c0_26] : memref<1x64xf32, #tpu.memory_space<vmem>>, vector<1x64xf32>
    %199 = vector.broadcast %198 : vector<1x64xf32> to vector<32x64xf32>
    %200 = arith.addf %197, %199 : vector<32x64xf32>
    %cst_27 = arith.constant 0.000000e+00 : f32
    %201 = vector.broadcast %cst_27 : f32 to vector<32x64xf32>
    %202 = arith.cmpf ogt, %200, %201 : vector<32x64xf32>
    %cst_28 = arith.constant 2.000000e-01 : f32
    %203 = vector.broadcast %cst_28 : f32 to vector<32x64xf32>
    %204 = arith.mulf %203, %200 : vector<32x64xf32>
    %205 = arith.select %202, %200, %204 : vector<32x64xi1>, vector<32x64xf32>
    %cst_29 = arith.constant 0.000000e+00 : f32
    %206 = vector.broadcast %cst_29 : f32 to vector<2x64xf32>
    %207 = vector.extract_strided_slice %205 {offsets = [0, 0], sizes = [2, 64], strides = [1, 1]} : vector<32x64xf32> to vector<2x64xf32>
    %208 = vector.extract_strided_slice %205 {offsets = [2, 0], sizes = [2, 64], strides = [1, 1]} : vector<32x64xf32> to vector<2x64xf32>
    %209 = vector.extract_strided_slice %205 {offsets = [8, 0], sizes = [2, 64], strides = [1, 1]} : vector<32x64xf32> to vector<2x64xf32>
    %210 = vector.extract_strided_slice %205 {offsets = [10, 0], sizes = [2, 64], strides = [1, 1]} : vector<32x64xf32> to vector<2x64xf32>
    %211 = tpu.concatenate %206, %206, %206, %206, %207, %208, %206, %209, %210 in 1 : vector<2x64xf32>, vector<2x64xf32>, vector<2x64xf32>, vector<2x64xf32>, vector<2x64xf32>, vector<2x64xf32>, vector<2x64xf32>, vector<2x64xf32>, vector<2x64xf32> -> vector<2x576xf32>
    %212 = vector.extract_strided_slice %205 {offsets = [2, 0], sizes = [2, 64], strides = [1, 1]} : vector<32x64xf32> to vector<2x64xf32>
    %213 = vector.extract_strided_slice %205 {offsets = [4, 0], sizes = [2, 64], strides = [1, 1]} : vector<32x64xf32> to vector<2x64xf32>
    %214 = vector.extract_strided_slice %205 {offsets = [6, 0], sizes = [2, 64], strides = [1, 1]} : vector<32x64xf32> to vector<2x64xf32>
    %215 = vector.extract_strided_slice %205 {offsets = [10, 0], sizes = [2, 64], strides = [1, 1]} : vector<32x64xf32> to vector<2x64xf32>
    %216 = vector.extract_strided_slice %205 {offsets = [12, 0], sizes = [2, 64], strides = [1, 1]} : vector<32x64xf32> to vector<2x64xf32>
    %217 = vector.extract_strided_slice %205 {offsets = [14, 0], sizes = [2, 64], strides = [1, 1]} : vector<32x64xf32> to vector<2x64xf32>
    %218 = tpu.concatenate %206, %206, %206, %212, %213, %214, %215, %216, %217 in 1 : vector<2x64xf32>, vector<2x64xf32>, vector<2x64xf32>, vector<2x64xf32>, vector<2x64xf32>, vector<2x64xf32>, vector<2x64xf32>, vector<2x64xf32>, vector<2x64xf32> -> vector<2x576xf32>
    %219 = vector.extract_strided_slice %205 {offsets = [8, 0], sizes = [2, 64], strides = [1, 1]} : vector<32x64xf32> to vector<2x64xf32>
    %220 = vector.extract_strided_slice %205 {offsets = [10, 0], sizes = [2, 64], strides = [1, 1]} : vector<32x64xf32> to vector<2x64xf32>
    %221 = vector.extract_strided_slice %205 {offsets = [16, 0], sizes = [2, 64], strides = [1, 1]} : vector<32x64xf32> to vector<2x64xf32>
    %222 = vector.extract_strided_slice %205 {offsets = [18, 0], sizes = [2, 64], strides = [1, 1]} : vector<32x64xf32> to vector<2x64xf32>
    %223 = vector.extract_strided_slice %205 {offsets = [24, 0], sizes = [2, 64], strides = [1, 1]} : vector<32x64xf32> to vector<2x64xf32>
    %224 = vector.extract_strided_slice %205 {offsets = [26, 0], sizes = [2, 64], strides = [1, 1]} : vector<32x64xf32> to vector<2x64xf32>
    %225 = tpu.concatenate %206, %219, %220, %206, %221, %222, %206, %223, %224 in 1 : vector<2x64xf32>, vector<2x64xf32>, vector<2x64xf32>, vector<2x64xf32>, vector<2x64xf32>, vector<2x64xf32>, vector<2x64xf32>, vector<2x64xf32>, vector<2x64xf32> -> vector<2x576xf32>
    %226 = vector.extract_strided_slice %205 {offsets = [10, 0], sizes = [2, 64], strides = [1, 1]} : vector<32x64xf32> to vector<2x64xf32>
    %227 = vector.extract_strided_slice %205 {offsets = [12, 0], sizes = [2, 64], strides = [1, 1]} : vector<32x64xf32> to vector<2x64xf32>
    %228 = vector.extract_strided_slice %205 {offsets = [14, 0], sizes = [2, 64], strides = [1, 1]} : vector<32x64xf32> to vector<2x64xf32>
    %229 = vector.extract_strided_slice %205 {offsets = [18, 0], sizes = [2, 64], strides = [1, 1]} : vector<32x64xf32> to vector<2x64xf32>
    %230 = vector.extract_strided_slice %205 {offsets = [20, 0], sizes = [2, 64], strides = [1, 1]} : vector<32x64xf32> to vector<2x64xf32>
    %231 = vector.extract_strided_slice %205 {offsets = [22, 0], sizes = [2, 64], strides = [1, 1]} : vector<32x64xf32> to vector<2x64xf32>
    %232 = vector.extract_strided_slice %205 {offsets = [26, 0], sizes = [2, 64], strides = [1, 1]} : vector<32x64xf32> to vector<2x64xf32>
    %233 = vector.extract_strided_slice %205 {offsets = [28, 0], sizes = [2, 64], strides = [1, 1]} : vector<32x64xf32> to vector<2x64xf32>
    %234 = vector.extract_strided_slice %205 {offsets = [30, 0], sizes = [2, 64], strides = [1, 1]} : vector<32x64xf32> to vector<2x64xf32>
    %235 = tpu.concatenate %226, %227, %228, %229, %230, %231, %232, %233, %234 in 1 : vector<2x64xf32>, vector<2x64xf32>, vector<2x64xf32>, vector<2x64xf32>, vector<2x64xf32>, vector<2x64xf32>, vector<2x64xf32>, vector<2x64xf32>, vector<2x64xf32> -> vector<2x576xf32>
    %236 = tpu.concatenate %211, %218, %225, %235 in 0 : vector<2x576xf32>, vector<2x576xf32>, vector<2x576xf32>, vector<2x576xf32> -> vector<8x576xf32>
    %c0_30 = arith.constant 0 : index
    %c0_31 = arith.constant 0 : index
    %237 = vector.load %arg8[%c0_30, %c0_31] : memref<576x128xf32, #tpu.memory_space<vmem>>, vector<576x128xf32>
    %cst_32 = arith.constant dense<0.000000e+00> : vector<8x128xf32>
    %238 = tpu.matmul %236, %237, %cst_32 {dimension_numbers = #tpu.dot_dimension_numbers<[1], [0], [0], [1], [0, 0, 1, 1], [], []>} : vector<8x576xf32>, vector<576x128xf32>, vector<8x128xf32> -> vector<8x128xf32>
    %cst_33 = arith.constant dense<0.000000e+00> : vector<128xf32>
    %239 = vector.multi_reduction <add>, %238, %cst_33 [0] : vector<8x128xf32> to vector<128xf32>
    %240 = vector.shape_cast %239 : vector<128xf32> to vector<1x128xf32>
    %cst_34 = arith.constant 8.000000e+00 : f32
    %241 = vector.broadcast %cst_34 : f32 to vector<1x128xf32>
    %242 = arith.divf %240, %241 : vector<1x128xf32>
    %243 = vector.broadcast %242 : vector<1x128xf32> to vector<8x128xf32>
    %244 = arith.subf %238, %243 : vector<8x128xf32>
    %245 = vector.broadcast %242 : vector<1x128xf32> to vector<8x128xf32>
    %246 = arith.subf %238, %245 : vector<8x128xf32>
    %247 = arith.mulf %244, %246 : vector<8x128xf32>
    %cst_35 = arith.constant dense<0.000000e+00> : vector<128xf32>
    %248 = vector.multi_reduction <add>, %247, %cst_35 [0] : vector<8x128xf32> to vector<128xf32>
    %249 = vector.shape_cast %248 : vector<128xf32> to vector<1x128xf32>
    %cst_36 = arith.constant 8.000000e+00 : f32
    %250 = vector.broadcast %cst_36 : f32 to vector<1x128xf32>
    %251 = arith.divf %249, %250 : vector<1x128xf32>
    %252 = vector.broadcast %242 : vector<1x128xf32> to vector<8x128xf32>
    %253 = arith.subf %238, %252 : vector<8x128xf32>
    %cst_37 = arith.constant 9.99999974E-6 : f32
    %254 = vector.broadcast %cst_37 : f32 to vector<1x128xf32>
    %255 = arith.addf %251, %254 : vector<1x128xf32>
    %256 = math.rsqrt %255 : vector<1x128xf32>
    %257 = vector.broadcast %256 : vector<1x128xf32> to vector<8x128xf32>
    %258 = arith.mulf %253, %257 : vector<8x128xf32>
    %c0_38 = arith.constant 0 : index
    %c0_39 = arith.constant 0 : index
    %259 = vector.load %arg9[%c0_38, %c0_39] : memref<1x128xf32, #tpu.memory_space<vmem>>, vector<1x128xf32>
    %260 = vector.broadcast %259 : vector<1x128xf32> to vector<8x128xf32>
    %261 = arith.mulf %258, %260 : vector<8x128xf32>
    %c0_40 = arith.constant 0 : index
    %c0_41 = arith.constant 0 : index
    %262 = vector.load %arg10[%c0_40, %c0_41] : memref<1x128xf32, #tpu.memory_space<vmem>>, vector<1x128xf32>
    %263 = vector.broadcast %262 : vector<1x128xf32> to vector<8x128xf32>
    %264 = arith.addf %261, %263 : vector<8x128xf32>
    %cst_42 = arith.constant 0.000000e+00 : f32
    %265 = vector.broadcast %cst_42 : f32 to vector<8x128xf32>
    %266 = arith.cmpf ogt, %264, %265 : vector<8x128xf32>
    %cst_43 = arith.constant 2.000000e-01 : f32
    %267 = vector.broadcast %cst_43 : f32 to vector<8x128xf32>
    %268 = arith.mulf %267, %264 : vector<8x128xf32>
    %269 = arith.select %266, %264, %268 : vector<8x128xi1>, vector<8x128xf32>
    %270 = vector.extract_strided_slice %269 {offsets = [0, 0], sizes = [2, 128], strides = [1, 1]} : vector<8x128xf32> to vector<2x128xf32>
    %271 = vector.extract_strided_slice %269 {offsets = [2, 0], sizes = [2, 128], strides = [1, 1]} : vector<8x128xf32> to vector<2x128xf32>
    %272 = vector.extract_strided_slice %269 {offsets = [4, 0], sizes = [2, 128], strides = [1, 1]} : vector<8x128xf32> to vector<2x128xf32>
    %273 = vector.extract_strided_slice %269 {offsets = [6, 0], sizes = [2, 128], strides = [1, 1]} : vector<8x128xf32> to vector<2x128xf32>
    %c0_44 = arith.constant 0 : index
    %c0_45 = arith.constant 0 : index
    %274 = vector.load %arg1[%c0_44, %c0_45] : memref<2x5xf32, #tpu.memory_space<vmem>>, vector<2x5xf32>
    %275 = tpu.concatenate %270, %271, %272, %273, %274 in 1 : vector<2x128xf32>, vector<2x128xf32>, vector<2x128xf32>, vector<2x128xf32>, vector<2x5xf32> -> vector<2x517xf32>
    %c0_46 = arith.constant 0 : index
    %c0_47 = arith.constant 0 : index
    %276 = vector.load %arg11[%c0_46, %c0_47] : memref<517x256xf32, #tpu.memory_space<vmem>>, vector<517x256xf32>
    %cst_48 = arith.constant dense<0.000000e+00> : vector<2x256xf32>
    %277 = tpu.matmul %275, %276, %cst_48 {dimension_numbers = #tpu.dot_dimension_numbers<[1], [0], [0], [1], [0, 0, 1, 1], [], []>} : vector<2x517xf32>, vector<517x256xf32>, vector<2x256xf32> -> vector<2x256xf32>
    %c0_49 = arith.constant 0 : index
    %c0_50 = arith.constant 0 : index
    %278 = vector.load %arg12[%c0_49, %c0_50] : memref<1x256xf32, #tpu.memory_space<vmem>>, vector<1x256xf32>
    %279 = vector.broadcast %278 : vector<1x256xf32> to vector<2x256xf32>
    %280 = arith.addf %277, %279 : vector<2x256xf32>
    %cst_51 = arith.constant dense<0.000000e+00> : vector<2xf32>
    %281 = vector.multi_reduction <add>, %280, %cst_51 [1] : vector<2x256xf32> to vector<2xf32>
    %282 = vector.shape_cast %281 : vector<2xf32> to vector<2x1xf32>
    %cst_52 = arith.constant 2.560000e+02 : f32
    %283 = vector.broadcast %cst_52 : f32 to vector<2x1xf32>
    %284 = arith.divf %282, %283 : vector<2x1xf32>
    %285 = vector.broadcast %284 : vector<2x1xf32> to vector<2x256xf32>
    %286 = arith.subf %280, %285 : vector<2x256xf32>
    %287 = vector.broadcast %284 : vector<2x1xf32> to vector<2x256xf32>
    %288 = arith.subf %280, %287 : vector<2x256xf32>
    %289 = arith.mulf %286, %288 : vector<2x256xf32>
    %cst_53 = arith.constant dense<0.000000e+00> : vector<2xf32>
    %290 = vector.multi_reduction <add>, %289, %cst_53 [1] : vector<2x256xf32> to vector<2xf32>
    %291 = vector.shape_cast %290 : vector<2xf32> to vector<2x1xf32>
    %cst_54 = arith.constant 2.560000e+02 : f32
    %292 = vector.broadcast %cst_54 : f32 to vector<2x1xf32>
    %293 = arith.divf %291, %292 : vector<2x1xf32>
    %294 = vector.broadcast %284 : vector<2x1xf32> to vector<2x256xf32>
    %295 = arith.subf %280, %294 : vector<2x256xf32>
    %cst_55 = arith.constant 9.99999974E-6 : f32
    %296 = vector.broadcast %cst_55 : f32 to vector<2x1xf32>
    %297 = arith.addf %293, %296 : vector<2x1xf32>
    %298 = math.rsqrt %297 : vector<2x1xf32>
    %299 = vector.broadcast %298 : vector<2x1xf32> to vector<2x256xf32>
    %300 = arith.mulf %295, %299 : vector<2x256xf32>
    %c0_56 = arith.constant 0 : index
    %c0_57 = arith.constant 0 : index
    %301 = vector.load %arg13[%c0_56, %c0_57] : memref<1x256xf32, #tpu.memory_space<vmem>>, vector<1x256xf32>
    %302 = vector.broadcast %301 : vector<1x256xf32> to vector<2x256xf32>
    %303 = arith.mulf %300, %302 : vector<2x256xf32>
    %c0_58 = arith.constant 0 : index
    %c0_59 = arith.constant 0 : index
    %304 = vector.load %arg14[%c0_58, %c0_59] : memref<1x256xf32, #tpu.memory_space<vmem>>, vector<1x256xf32>
    %305 = vector.broadcast %304 : vector<1x256xf32> to vector<2x256xf32>
    %306 = arith.addf %303, %305 : vector<2x256xf32>
    %cst_60 = arith.constant 0.000000e+00 : f32
    %307 = vector.broadcast %cst_60 : f32 to vector<2x256xf32>
    %308 = arith.cmpf ogt, %306, %307 : vector<2x256xf32>
    %cst_61 = arith.constant 2.000000e-01 : f32
    %309 = vector.broadcast %cst_61 : f32 to vector<2x256xf32>
    %310 = arith.mulf %309, %306 : vector<2x256xf32>
    %311 = arith.select %308, %306, %310 : vector<2x256xi1>, vector<2x256xf32>
    %c0_62 = arith.constant 0 : index
    %c0_63 = arith.constant 0 : index
    %312 = vector.load %arg15[%c0_62, %c0_63] : memref<1x256xf32, #tpu.memory_space<vmem>>, vector<1x256xf32>
    %313 = vector.broadcast %312 : vector<1x256xf32> to vector<2x256xf32>
    %314 = arith.mulf %311, %313 : vector<2x256xf32>
    %cst_64 = arith.constant dense<0.000000e+00> : vector<2xf32>
    %315 = vector.multi_reduction <add>, %314, %cst_64 [1] : vector<2x256xf32> to vector<2xf32>
    %316 = vector.shape_cast %315 : vector<2xf32> to vector<2x1xf32>
    %c0_65 = arith.constant 0 : index
    %c0_66 = arith.constant 0 : index
    %317 = vector.load %arg16[%c0_65, %c0_66] : memref<1x1xf32, #tpu.memory_space<vmem>>, vector<1x1xf32>
    %318 = vector.broadcast %317 : vector<1x1xf32> to vector<2x1xf32>
    %319 = arith.addf %316, %318 : vector<2x1xf32>
    %320 = arith.negf %319 : vector<2x1xf32>
    %321 = math.exp %320 : vector<2x1xf32>
    %cst_67 = arith.constant 1.000000e+00 : f32
    %322 = vector.broadcast %cst_67 : f32 to vector<2x1xf32>
    %323 = arith.addf %322, %321 : vector<2x1xf32>
    %324 = arith.divf %322, %323 : vector<2x1xf32>
    %c0_68 = arith.constant 0 : index
    %c0_69 = arith.constant 0 : index
    %325 = vector.load %arg17[%c0_68, %c0_69] : memref<2x1xf32, #tpu.memory_space<vmem>>, vector<2x1xf32>
    tpu.vector_store %arg17[%c0_68, %c0_69], %324 {strides = array<i32>} : memref<2x1xf32, #tpu.memory_space<vmem>>, vector<2x1xf32>,
    return
  }
}

</mosaic_0001>

<llo_original>
// kernel: discriminator_forward.1
$region0: #{discriminator_forward.1}
  #allocation0 [shape = 'u32[]', space=smem, size = 0x4, offset = 0x4, fixed_abs, tag = 'smem constant byte address 0x4 - core index']
  #allocation1 [shape = 'u32[72,128]{1,0:T(1,128)}', space=vmem, size = 0x9000, scoped, tag = 'internal scratch']
  #allocation2 [shape = 'f32[1,1]{1,0:T(1,128)S(1)}', space=vmem, size = 0x200, scoped, tag = 'scoped memory for discriminator_forward.1']
  %s0 = inlined_call_operand.vmem [shape: f32[128,27], index: 0, kind: input, shape index: {}]
  %s1 = inlined_call_operand.vmem [shape: f32[2,5], index: 1, kind: input, shape index: {}]
  %s2 = inlined_call_operand.vmem [shape: f32[27,32], index: 2, kind: input, shape index: {}]
  %s3 = inlined_call_operand.vmem [shape: f32[1,32], index: 3, kind: input, shape index: {}]
  %s4 = inlined_call_operand.vmem [shape: f32[1,32], index: 4, kind: input, shape index: {}]
  %s5 = inlined_call_operand.vmem [shape: f32[288,64], index: 5, kind: input, shape index: {}]
  %s6 = inlined_call_operand.vmem [shape: f32[1,64], index: 6, kind: input, shape index: {}]
  %s7 = inlined_call_operand.vmem [shape: f32[1,64], index: 7, kind: input, shape index: {}]
  %s8 = inlined_call_operand.vmem [shape: f32[576,128], index: 8, kind: input, shape index: {}]
  %s9 = inlined_call_operand.vmem [shape: f32[1,128], index: 9, kind: input, shape index: {}]
  %s10 = inlined_call_operand.vmem [shape: f32[1,128], index: 10, kind: input, shape index: {}]
  %s11 = inlined_call_operand.vmem [shape: f32[517,256], index: 11, kind: input, shape index: {}]
  %s12 = inlined_call_operand.vmem [shape: f32[1,256], index: 12, kind: input, shape index: {}]
  %s13 = inlined_call_operand.vmem [shape: f32[1,256], index: 13, kind: input, shape index: {}]
  %s14 = inlined_call_operand.vmem [shape: f32[1,256], index: 14, kind: input, shape index: {}]
  %s15 = inlined_call_operand.vmem [shape: f32[1,256], index: 15, kind: input, shape index: {}]
  %s16 = inlined_call_operand.<no memory space> [shape: f32[1,1], index: 16, kind: input, shape index: {}]
  %s17 = inlined_call_operand.vmem [shape: f32[2,1], index: 17, kind: output, shape index: {}]
  %s18 = sld [smem:[#allocation0]]
  $region78: #{discriminator_forward.1} parent=0
    _
  %s20 = ssub.s32 1, %s18
  %s21 = scalar_select 0, %s20, %s18
  %v22 = vstv %s16
  %23 = vst [vmem:[#allocation2] sm:$0x1] %v22
  // Predicated region
  $region2: #{discriminator_forward.1} parent=0 // pred_check
    _
  $region3: #{discriminator_forward.1} parent=0 // pred_check_branch
    %25 = sbr.rel (0) target = $region5
  $region4: #{discriminator_forward.1} parent=0 // pred_region
    _
  $region5: #{discriminator_forward.1} parent=0 // pred_fallthru
    _
  // Predicated region
  $region6: #{discriminator_forward.1} parent=0 // pred_check
    _
  $region7: #{discriminator_forward.1} parent=0 // pred_check_branch
    %27 = sbr.rel (0) target = $region9
  $region8: #{discriminator_forward.1} parent=0 // pred_region
    _
  $region9: #{discriminator_forward.1} parent=0 // pred_fallthru
    _
  // Predicated region
  $region10: #{discriminator_forward.1} parent=0 // pred_check
    _
  $region11: #{discriminator_forward.1} parent=0 // pred_check_branch
    %29 = sbr.rel (0) target = $region13
  $region12: #{discriminator_forward.1} parent=0 // pred_region
    _
  $region13: #{discriminator_forward.1} parent=0 // pred_fallthru
    _
  // Predicated region
  $region14: #{discriminator_forward.1} parent=0 // pred_check
    _
  $region15: #{discriminator_forward.1} parent=0 // pred_check_branch
    %31 = sbr.rel (0) target = $region17
  $region16: #{discriminator_forward.1} parent=0 // pred_region
    _
  $region17: #{discriminator_forward.1} parent=0 // pred_fallthru
    _
  // Predicated region
  $region18: #{discriminator_forward.1} parent=0 // pred_check
    _
  $region19: #{discriminator_forward.1} parent=0 // pred_check_branch
    %33 = sbr.rel (0) target = $region21
  $region20: #{discriminator_forward.1} parent=0 // pred_region
    _
  $region21: #{discriminator_forward.1} parent=0 // pred_fallthru
    _
  // Predicated region
  $region22: #{discriminator_forward.1} parent=0 // pred_check
    _
  $region23: #{discriminator_forward.1} parent=0 // pred_check_branch
    %35 = sbr.rel (0) target = $region25
  $region24: #{discriminator_forward.1} parent=0 // pred_region
    _
  $region25: #{discriminator_forward.1} parent=0 // pred_fallthru
    _
  // Predicated region
  $region26: #{discriminator_forward.1} parent=0 // pred_check
    _
  $region27: #{discriminator_forward.1} parent=0 // pred_check_branch
    %37 = sbr.rel (0) target = $region29
  $region28: #{discriminator_forward.1} parent=0 // pred_region
    _
  $region29: #{discriminator_forward.1} parent=0 // pred_fallthru
    _
  // Predicated region
  $region30: #{discriminator_forward.1} parent=0 // pred_check
    _
  $region31: #{discriminator_forward.1} parent=0 // pred_check_branch
    %39 = sbr.rel (0) target = $region33
  $region32: #{discriminator_forward.1} parent=0 // pred_region
    _
  $region33: #{discriminator_forward.1} parent=0 // pred_fallthru
    _
  // Predicated region
  $region34: #{discriminator_forward.1} parent=0 // pred_check
    _
  $region35: #{discriminator_forward.1} parent=0 // pred_check_branch
    %41 = sbr.rel (0) target = $region37
  $region36: #{discriminator_forward.1} parent=0 // pred_region
    _
  $region37: #{discriminator_forward.1} parent=0 // pred_fallthru
    _
  // Predicated region
  $region38: #{discriminator_forward.1} parent=0 // pred_check
    _
  $region39: #{discriminator_forward.1} parent=0 // pred_check_branch
    %43 = sbr.rel (0) target = $region41
  $region40: #{discriminator_forward.1} parent=0 // pred_region
    _
  $region41: #{discriminator_forward.1} parent=0 // pred_fallthru
    _
  // Predicated region
  $region42: #{discriminator_forward.1} parent=0 // pred_check
    _
  $region43: #{discriminator_forward.1} parent=0 // pred_check_branch
    %45 = sbr.rel (0) target = $region45
  $region44: #{discriminator_forward.1} parent=0 // pred_region
    _
  $region45: #{discriminator_forward.1} parent=0 // pred_fallthru
    _
  // Predicated region
  $region46: #{discriminator_forward.1} parent=0 // pred_check
    _
  $region47: #{discriminator_forward.1} parent=0 // pred_check_branch
    %47 = sbr.rel (0) target = $region49
  $region48: #{discriminator_forward.1} parent=0 // pred_region
    _
  $region49: #{discriminator_forward.1} parent=0 // pred_fallthru
    _
  // Predicated region
  $region50: #{discriminator_forward.1} parent=0 // pred_check
    _
  $region51: #{discriminator_forward.1} parent=0 // pred_check_branch
    %49 = sbr.rel (0) target = $region53
  $region52: #{discriminator_forward.1} parent=0 // pred_region
    _
  $region53: #{discriminator_forward.1} parent=0 // pred_fallthru
    _
  // Predicated region
  $region54: #{discriminator_forward.1} parent=0 // pred_check
    _
  $region55: #{discriminator_forward.1} parent=0 // pred_check_branch
    %51 = sbr.rel (0) target = $region57
  $region56: #{discriminator_forward.1} parent=0 // pred_region
    _
  $region57: #{discriminator_forward.1} parent=0 // pred_fallthru
    _
  // Predicated region
  $region58: #{discriminator_forward.1} parent=0 // pred_check
    _
  $region59: #{discriminator_forward.1} parent=0 // pred_check_branch
    %53 = sbr.rel (0) target = $region61
  $region60: #{discriminator_forward.1} parent=0 // pred_region
    _
  $region61: #{discriminator_forward.1} parent=0 // pred_fallthru
    _
  // Predicated region
  $region62: #{discriminator_forward.1} parent=0 // pred_check
    _
  $region63: #{discriminator_forward.1} parent=0 // pred_check_branch
    %55 = sbr.rel (0) target = $region65
  $region64: #{discriminator_forward.1} parent=0 // pred_region
    _
  $region65: #{discriminator_forward.1} parent=0 // pred_fallthru
    _
  // Predicated region
  $region66: #{discriminator_forward.1} parent=0 // pred_check
    _
  $region67: #{discriminator_forward.1} parent=0 // pred_check_branch
    %57 = sbr.rel (0) target = $region69
  $region68: #{discriminator_forward.1} parent=0 // pred_region
    _
  $region69: #{discriminator_forward.1} parent=0 // pred_fallthru
    _
  %v58 = vld [vmem:[%s0] sm:$0xff]
  %v59 = vld [vmem:[%s0 + $0x8] sm:$0xff]
  %v60 = vld [vmem:[%s0 + $0x10] sm:$0xff]
  %v61 = vld [vmem:[%s0 + $0x18] sm:$0xff]
  %v62 = vld [vmem:[%s0 + $0x20] sm:$0xff]
  %v63 = vld [vmem:[%s0 + $0x28] sm:$0xff]
  %v64 = vld [vmem:[%s0 + $0x30] sm:$0xff]
  %v65 = vld [vmem:[%s0 + $0x38] sm:$0xff]
  %v66 = vld [vmem:[%s0 + $0x40] sm:$0xff]
  %v67 = vld [vmem:[%s0 + $0x48] sm:$0xff]
  %v68 = vld [vmem:[%s0 + $0x50] sm:$0xff]
  %v69 = vld [vmem:[%s0 + $0x58] sm:$0xff]
  %v70 = vld [vmem:[%s0 + $0x60] sm:$0xff]
  %v71 = vld [vmem:[%s0 + $0x68] sm:$0xff]
  %v72 = vld [vmem:[%s0 + $0x70] sm:$0xff]
  %v73 = vld [vmem:[%s0 + $0x78] sm:$0xff]
  %v74 = vld [vmem:[%s2] sm:$0xff]
  %v75 = vld [vmem:[%s2 + $0x8] sm:$0xff]
  %v76 = vld [vmem:[%s2 + $0x10] sm:$0xff]
  %v77 = vld [vmem:[%s2 + $0x18] sm:$0x7]
  %vm78 = vcmask 220160
  %v80 = vsel %vm78, %v58, 0
  %v83 = vsel %vm78, %v59, 0
  %v86 = vsel %vm78, %v60, 0
  %v89 = vsel %vm78, %v61, 0
  %v92 = vsel %vm78, %v62, 0
  %v95 = vsel %vm78, %v63, 0
  %v98 = vsel %vm78, %v64, 0
  %v101 = vsel %vm78, %v65, 0
  %v104 = vsel %vm78, %v66, 0
  %v107 = vsel %vm78, %v67, 0
  %v110 = vsel %vm78, %v68, 0
  %v113 = vsel %vm78, %v69, 0
  %v116 = vsel %vm78, %v70, 0
  %v119 = vsel %vm78, %v71, 0
  %v122 = vsel %vm78, %v72, 0
  %v125 = vsel %vm78, %v73, 0
  %vm127 = vcmask 1042432
  %v129 = vsel %vm127, %v77, 0
  %131 = vmatpush.msra.mxu0 0.0
  %132 = vmatpush.msra.mxu0 0.0
  %133 = vmatpush.msra.mxu0 0.0
  %134 = vmatpush.msra.mxu0 0.0
  %135 = vmatpush.msra.mxu0 0.0
  %136 = vmatpush.msra.mxu0 0.0
  %137 = vmatpush.msra.mxu0 0.0
  %138 = vmatpush.msra.mxu0 0.0
  %139 = vmatpush.msra.mxu0 0.0
  %140 = vmatpush.msra.mxu0 0.0
  %141 = vmatpush.msra.mxu0 0.0
  %142 = vmatpush.msra.mxu0 0.0
  %143 = vmatpush.msra.mxu0 %v129
  %144 = vmatpush.msra.mxu0 %v76
  %145 = vmatpush.msra.mxu0 %v75
  %146 = vmatpush.msra.mxu0 %v74
  %147 = vmatmul.f32.gmra.mxu0 %v80
  %v148 = vpop.f32.mrf.mxu0
  %v149 = vadd.f32 0.0, %v148
  %150 = vmatmul.f32.gmra.mxu0 %v83
  %v151 = vpop.f32.mrf.mxu0
  %v152 = vadd.f32 0.0, %v151
  %153 = vmatmul.f32.gmra.mxu0 %v86
  %v154 = vpop.f32.mrf.mxu0
  %v155 = vadd.f32 0.0, %v154
  %156 = vmatmul.f32.gmra.mxu0 %v89
  %v157 = vpop.f32.mrf.mxu0
  %v158 = vadd.f32 0.0, %v157
  %159 = vmatmul.f32.gmra.mxu0 %v92
  %v160 = vpop.f32.mrf.mxu0
  %v161 = vadd.f32 0.0, %v160
  %162 = vmatmul.f32.gmra.mxu0 %v95
  %v163 = vpop.f32.mrf.mxu0
  %v164 = vadd.f32 0.0, %v163
  %165 = vmatmul.f32.gmra.mxu0 %v98
  %v166 = vpop.f32.mrf.mxu0
  %v167 = vadd.f32 0.0, %v166
  %168 = vmatmul.f32.gmra.mxu0 %v101
  %v169 = vpop.f32.mrf.mxu0
  %v170 = vadd.f32 0.0, %v169
  %171 = vmatmul.f32.gmra.mxu0 %v104
  %v172 = vpop.f32.mrf.mxu0
  %v173 = vadd.f32 0.0, %v172
  %174 = vmatmul.f32.gmra.mxu0 %v107
  %v175 = vpop.f32.mrf.mxu0
  %v176 = vadd.f32 0.0, %v175
  %177 = vmatmul.f32.gmra.mxu0 %v110
  %v178 = vpop.f32.mrf.mxu0
  %v179 = vadd.f32 0.0, %v178
  %180 = vmatmul.f32.gmra.mxu0 %v113
  %v181 = vpop.f32.mrf.mxu0
  %v182 = vadd.f32 0.0, %v181
  %183 = vmatmul.f32.gmra.mxu0 %v116
  %v184 = vpop.f32.mrf.mxu0
  %v185 = vadd.f32 0.0, %v184
  %186 = vmatmul.f32.gmra.mxu0 %v119
  %v187 = vpop.f32.mrf.mxu0
  %v188 = vadd.f32 0.0, %v187
  %189 = vmatmul.f32.gmra.mxu0 %v122
  %v190 = vpop.f32.mrf.mxu0
  %v191 = vadd.f32 0.0, %v190
  %192 = vmatmul.f32.gmra.mxu0 %v125
  %v193 = vpop.f32.mrf.mxu0
  %v194 = vadd.f32 0.0, %v193
  %195 = vdwg.mxu0
  %vm196 = vcmask 261120
  %v197 = vsel %vm196, %v149, 0.0
  %v198 = vsel %vm196, %v152, 0.0
  %v199 = vadd.f32 %v197, %v198
  %v200 = vsel %vm196, %v155, 0.0
  %v201 = vadd.f32 %v199, %v200
  %v202 = vsel %vm196, %v158, 0.0
  %v203 = vadd.f32 %v201, %v202
  %v204 = vsel %vm196, %v161, 0.0
  %v205 = vadd.f32 %v203, %v204
  %v206 = vsel %vm196, %v164, 0.0
  %v207 = vadd.f32 %v205, %v206
  %v208 = vsel %vm196, %v167, 0.0
  %v209 = vadd.f32 %v207, %v208
  %v210 = vsel %vm196, %v170, 0.0
  %v211 = vadd.f32 %v209, %v210
  %v212 = vsel %vm196, %v173, 0.0
  %v213 = vadd.f32 %v211, %v212
  %v214 = vsel %vm196, %v176, 0.0
  %v215 = vadd.f32 %v213, %v214
  %v216 = vsel %vm196, %v179, 0.0
  %v217 = vadd.f32 %v215, %v216
  %v218 = vsel %vm196, %v182, 0.0
  %v219 = vadd.f32 %v217, %v218
  %v220 = vsel %vm196, %v185, 0.0
  %v221 = vadd.f32 %v219, %v220
  %v222 = vsel %vm196, %v188, 0.0
  %v223 = vadd.f32 %v221, %v222
  %v224 = vsel %vm196, %v191, 0.0
  %v225 = vadd.f32 %v223, %v224
  %v226 = vsel %vm196, %v194, 0.0
  %v227 = vadd.f32 %v225, %v226
  %v228 = vrot.slane %v227, 4
  %v229 = vadd.f32 %v227, %v228
  %v230 = vrot.slane %v229, 2
  %v231 = vadd.f32 %v229, %v230
  %v232 = vrot.slane %v231, 1
  %v233 = vadd.f32 %v231, %v232
  %v234 = vrcp.pop 128.0
  %v235 = vmul.f32 128.0, %v234
  %v236 = vsub.f32 1.0, %v235
  %v237 = vmul.f32 %v234, %v236
  %v238 = vadd.f32 %v234, %v237
  %vm239 = vweird.f32 %v234
  %v240 = vsel %vm239, %v234, %v238
  %v241 = vmul.f32 %v233, %v240
  %v242 = vsub.f32 %v149, %v241
  %v243 = vsub.f32 %v152, %v241
  %v244 = vsub.f32 %v155, %v241
  %v245 = vsub.f32 %v158, %v241
  %v246 = vsub.f32 %v161, %v241
  %v247 = vsub.f32 %v164, %v241
  %v248 = vsub.f32 %v167, %v241
  %v249 = vsub.f32 %v170, %v241
  %v250 = vsub.f32 %v173, %v241
  %v251 = vsub.f32 %v176, %v241
  %v252 = vsub.f32 %v179, %v241
  %v253 = vsub.f32 %v182, %v241
  %v254 = vsub.f32 %v185, %v241
  %v255 = vsub.f32 %v188, %v241
  %v256 = vsub.f32 %v191, %v241
  %v257 = vsub.f32 %v194, %v241
  %v258 = vmul.f32 %v242, %v242
  %v259 = vmul.f32 %v243, %v243
  %v260 = vmul.f32 %v244, %v244
  %v261 = vmul.f32 %v245, %v245
  %v262 = vmul.f32 %v246, %v246
  %v263 = vmul.f32 %v247, %v247
  %v264 = vmul.f32 %v248, %v248
  %v265 = vmul.f32 %v249, %v249
  %v266 = vmul.f32 %v250, %v250
  %v267 = vmul.f32 %v251, %v251
  %v268 = vmul.f32 %v252, %v252
  %v269 = vmul.f32 %v253, %v253
  %v270 = vmul.f32 %v254, %v254
  %v271 = vmul.f32 %v255, %v255
  %v272 = vmul.f32 %v256, %v256
  %v273 = vmul.f32 %v257, %v257
  %v274 = vsel %vm196, %v258, 0.0
  %v275 = vsel %vm196, %v259, 0.0
  %v276 = vadd.f32 %v274, %v275
  %v277 = vsel %vm196, %v260, 0.0
  %v278 = vadd.f32 %v276, %v277
  %v279 = vsel %vm196, %v261, 0.0
  %v280 = vadd.f32 %v278, %v279
  %v281 = vsel %vm196, %v262, 0.0
  %v282 = vadd.f32 %v280, %v281
  %v283 = vsel %vm196, %v263, 0.0
  %v284 = vadd.f32 %v282, %v283
  %v285 = vsel %vm196, %v264, 0.0
  %v286 = vadd.f32 %v284, %v285
  %v287 = vsel %vm196, %v265, 0.0
  %v288 = vadd.f32 %v286, %v287
  %v289 = vsel %vm196, %v266, 0.0
  %v290 = vadd.f32 %v288, %v289
  %v291 = vsel %vm196, %v267, 0.0
  %v292 = vadd.f32 %v290, %v291
  %v293 = vsel %vm196, %v268, 0.0
  %v294 = vadd.f32 %v292, %v293
  %v295 = vsel %vm196, %v269, 0.0
  %v296 = vadd.f32 %v294, %v295
  %v297 = vsel %vm196, %v270, 0.0
  %v298 = vadd.f32 %v296, %v297
  %v299 = vsel %vm196, %v271, 0.0
  %v300 = vadd.f32 %v298, %v299
  %v301 = vsel %vm196, %v272, 0.0
  %v302 = vadd.f32 %v300, %v301
  %v303 = vsel %vm196, %v273, 0.0
  %v304 = vadd.f32 %v302, %v303
  %v305 = vrot.slane %v304, 4
  %v306 = vadd.f32 %v304, %v305
  %v307 = vrot.slane %v306, 2
  %v308 = vadd.f32 %v306, %v307
  %v309 = vrot.slane %v308, 1
  %v310 = vadd.f32 %v308, %v309
  %v311 = vmul.f32 %v310, %v240
  %v312 = vadd.f32 %v311, 1e-05
  %v313 = vrsqrt.pop %v312
  %v314 = vmul.f32 %v313, %v312
  %v315 = vmul.f32 %v314, %v313
  %v316 = vmul.f32 0.5, %v315
  %v317 = vsub.f32 1.5, %v316
  %v318 = vmul.f32 %v313, %v317
  %vm319 = vweird.f32 %v312
  %vm320 = vweird.f32 %v313
  %vm321 = vmor %vm319, %vm320
  %v322 = vsel %vm321, %v313, %v318
  %v323 = vmul.f32 %v242, %v322
  %v324 = vmul.f32 %v243, %v322
  %v325 = vmul.f32 %v244, %v322
  %v326 = vmul.f32 %v245, %v322
  %v327 = vmul.f32 %v246, %v322
  %v328 = vmul.f32 %v247, %v322
  %v329 = vmul.f32 %v248, %v322
  %v330 = vmul.f32 %v249, %v322
  %v331 = vmul.f32 %v250, %v322
  %v332 = vmul.f32 %v251, %v322
  %v333 = vmul.f32 %v252, %v322
  %v334 = vmul.f32 %v253, %v322
  %v335 = vmul.f32 %v254, %v322
  %v336 = vmul.f32 %v255, %v322
  %v337 = vmul.f32 %v256, %v322
  %v338 = vmul.f32 %v257, %v322
  %v339 = vld [vmem:[%s3] sm:$0x1]
  %v341 = vperm.slane %v339, 0
  %v343 = vmul.f32 %v323, %v341
  %v344 = vmul.f32 %v324, %v341
  %v345 = vmul.f32 %v325, %v341
  %v346 = vmul.f32 %v326, %v341
  %v347 = vmul.f32 %v327, %v341
  %v348 = vmul.f32 %v328, %v341
  %v349 = vmul.f32 %v329, %v341
  %v350 = vmul.f32 %v330, %v341
  %v351 = vmul.f32 %v331, %v341
  %v352 = vmul.f32 %v332, %v341
  %v353 = vmul.f32 %v333, %v341
  %v354 = vmul.f32 %v334, %v341
  %v355 = vmul.f32 %v335, %v341
  %v356 = vmul.f32 %v336, %v341
  %v357 = vmul.f32 %v337, %v341
  %v358 = vmul.f32 %v338, %v341
  %v359 = vld [vmem:[%s4] sm:$0x1]
  %v361 = vperm.slane %v359, 0
  %v363 = vadd.f32 %v343, %v361
  %v364 = vadd.f32 %v344, %v361
  %v365 = vadd.f32 %v345, %v361
  %v366 = vadd.f32 %v346, %v361
  %v367 = vadd.f32 %v347, %v361
  %v368 = vadd.f32 %v348, %v361
  %v369 = vadd.f32 %v349, %v361
  %v370 = vadd.f32 %v350, %v361
  %v371 = vadd.f32 %v351, %v361
  %v372 = vadd.f32 %v352, %v361
  %v373 = vadd.f32 %v353, %v361
  %v374 = vadd.f32 %v354, %v361
  %v375 = vadd.f32 %v355, %v361
  %v376 = vadd.f32 %v356, %v361
  %v377 = vadd.f32 %v357, %v361
  %v378 = vadd.f32 %v358, %v361
  %vm379 = vcmp.gt.f32.partialorder %v363, 0.0
  %vm380 = vcmp.gt.f32.partialorder %v364, 0.0
  %vm381 = vcmp.gt.f32.partialorder %v365, 0.0
  %vm382 = vcmp.gt.f32.partialorder %v366, 0.0
  %vm383 = vcmp.gt.f32.partialorder %v367, 0.0
  %vm384 = vcmp.gt.f32.partialorder %v368, 0.0
  %vm385 = vcmp.gt.f32.partialorder %v369, 0.0
  %vm386 = vcmp.gt.f32.partialorder %v370, 0.0
  %vm387 = vcmp.gt.f32.partialorder %v371, 0.0
  %vm388 = vcmp.gt.f32.partialorder %v372, 0.0
  %vm389 = vcmp.gt.f32.partialorder %v373, 0.0
  %vm390 = vcmp.gt.f32.partialorder %v374, 0.0
  %vm391 = vcmp.gt.f32.partialorder %v375, 0.0
  %vm392 = vcmp.gt.f32.partialorder %v376, 0.0
  %vm393 = vcmp.gt.f32.partialorder %v377, 0.0
  %vm394 = vcmp.gt.f32.partialorder %v378, 0.0
  %v395 = vmul.f32 %v363, 0.2
  %v396 = vmul.f32 %v364, 0.2
  %v397 = vmul.f32 %v365, 0.2
  %v398 = vmul.f32 %v366, 0.2
  %v399 = vmul.f32 %v367, 0.2
  %v400 = vmul.f32 %v368, 0.2
  %v401 = vmul.f32 %v369, 0.2
  %v402 = vmul.f32 %v370, 0.2
  %v403 = vmul.f32 %v371, 0.2
  %v404 = vmul.f32 %v372, 0.2
  %v405 = vmul.f32 %v373, 0.2
  %v406 = vmul.f32 %v374, 0.2
  %v407 = vmul.f32 %v375, 0.2
  %v408 = vmul.f32 %v376, 0.2
  %v409 = vmul.f32 %v377, 0.2
  %v410 = vmul.f32 %v378, 0.2
  %v411 = vsel %vm379, %v363, %v395
  %v412 = vsel %vm380, %v364, %v396
  %v413 = vsel %vm381, %v365, %v397
  %v414 = vsel %vm382, %v366, %v398
  %v415 = vsel %vm383, %v367, %v399
  %v416 = vsel %vm384, %v368, %v400
  %v417 = vsel %vm385, %v369, %v401
  %v418 = vsel %vm386, %v370, %v402
  %v419 = vsel %vm387, %v371, %v403
  %v420 = vsel %vm388, %v372, %v404
  %v421 = vsel %vm389, %v373, %v405
  %v422 = vsel %vm390, %v374, %v406
  %v423 = vsel %vm391, %v375, %v407
  %v424 = vsel %vm392, %v376, %v408
  %v425 = vsel %vm393, %v377, %v409
  %v426 = vsel %vm394, %v378, %v410
  %v428 = vrot.slane %v411, 2
  %429 = vrot.lane.b32.xlu0 %v428, 32
  %v430 = vpop.permute.xlu0 %429
  %433 = vrot.lane.b32.xlu0 %v413, 96
  %v434 = vpop.permute.xlu0 %433
  %v436 = vrot.slane %v413, 2
  %v438 = vsel %vm196, %v411, %v430
  %vm439 = vcmask 523264
  %v440 = vsel %vm439, %v438, 0.0
  %vm441 = vcmask 785408
  %v442 = vsel %vm441, %v440, %v434
  %443 = vrot.lane.b32.xlu0 %v428, 96
  %v444 = vpop.permute.xlu0 %443
  %v446 = vrot.slane %v411, 4
  %v448 = vrot.slane %v411, 6
  %449 = vrot.lane.b32.xlu0 %v448, 32
  %v450 = vpop.permute.xlu0 %449
  %452 = vrot.lane.b32.xlu0 %v436, 64
  %v453 = vpop.permute.xlu0 %452
  %v455 = vrot.slane %v413, 4
  %456 = vrot.lane.b32.xlu0 %v455, 96
  %v457 = vpop.permute.xlu0 %456
  %v459 = vrot.slane %v413, 6
  %v460 = vsel %vm441, 0.0, %v444
  %v461 = vsel %vm196, %v446, %v450
  %v462 = vsel %vm439, %v461, %v453
  %v463 = vsel %vm441, %v462, %v457
  %464 = vrot.lane.b32.xlu0 %v448, 96
  %v465 = vpop.permute.xlu0 %464
  %v468 = vrot.slane %v412, 2
  %469 = vrot.lane.b32.xlu0 %v468, 32
  %v470 = vpop.permute.xlu0 %469
  %472 = vrot.lane.b32.xlu0 %v459, 64
  %v473 = vpop.permute.xlu0 %472
  %476 = vrot.lane.b32.xlu0 %v414, 96
  %v477 = vpop.permute.xlu0 %476
  %v479 = vrot.slane %v414, 2
  %v480 = vsel %vm441, 0.0, %v465
  %v481 = vsel %vm196, %v412, %v470
  %v482 = vsel %vm439, %v481, %v473
  %v483 = vsel %vm441, %v482, %v477
  %484 = vrot.lane.b32.xlu0 %v468, 96
  %v485 = vpop.permute.xlu0 %484
  %v487 = vrot.slane %v412, 4
  %v489 = vrot.slane %v412, 6
  %490 = vrot.lane.b32.xlu0 %v489, 32
  %v491 = vpop.permute.xlu0 %490
  %493 = vrot.lane.b32.xlu0 %v479, 64
  %v494 = vpop.permute.xlu0 %493
  %v496 = vrot.slane %v414, 4
  %497 = vrot.lane.b32.xlu0 %v496, 96
  %v498 = vpop.permute.xlu0 %497
  %v500 = vrot.slane %v414, 6
  %v501 = vsel %vm441, 0.0, %v485
  %v502 = vsel %vm196, %v487, %v491
  %v503 = vsel %vm439, %v502, %v494
  %v504 = vsel %vm441, %v503, %v498
  %505 = vrot.lane.b32.xlu0 %v413, 32
  %v506 = vpop.permute.xlu0 %505
  %v509 = vrot.slane %v415, 2
  %510 = vrot.lane.b32.xlu0 %v509, 32
  %v511 = vpop.permute.xlu0 %510
  %514 = vrot.lane.b32.xlu0 %v417, 96
  %v515 = vpop.permute.xlu0 %514
  %v517 = vrot.slane %v417, 2
  %v519 = vsel %vm196, 0.0, %v506
  %v520 = vsel %vm439, %v519, %v453
  %v521 = vsel %vm441, %v520, 0.0
  %v522 = vsel %vm196, %v415, %v511
  %v523 = vsel %vm439, %v522, 0.0
  %v524 = vsel %vm441, %v523, %v515
  %525 = vrot.lane.b32.xlu0 %v436, 32
  %v526 = vpop.permute.xlu0 %525
  %528 = vrot.lane.b32.xlu0 %v455, 64
  %v529 = vpop.permute.xlu0 %528
  %531 = vrot.lane.b32.xlu0 %v415, 96
  %v532 = vpop.permute.xlu0 %531
  %v535 = vrot.slane %v415, 4
  %536 = vrot.lane.b32.xlu0 %v535, 32
  %v537 = vpop.permute.xlu0 %536
  %539 = vrot.lane.b32.xlu0 %v417, 64
  %v540 = vpop.permute.xlu0 %539
  %542 = vrot.lane.b32.xlu0 %v517, 96
  %v543 = vpop.permute.xlu0 %542
  %v545 = vrot.slane %v417, 4
  %v547 = vsel %vm196, %v413, %v526
  %v548 = vsel %vm439, %v547, %v529
  %v549 = vsel %vm441, %v548, %v532
  %v550 = vsel %vm196, %v509, %v537
  %v551 = vsel %vm439, %v550, %v540
  %v552 = vsel %vm441, %v551, %v543
  %553 = vrot.lane.b32.xlu0 %v479, 32
  %v554 = vpop.permute.xlu0 %553
  %556 = vrot.lane.b32.xlu0 %v496, 64
  %v557 = vpop.permute.xlu0 %556
  %v560 = vrot.slane %v416, 2
  %v562 = vrot.slane %v416, 4
  %563 = vrot.lane.b32.xlu0 %v562, 32
  %v564 = vpop.permute.xlu0 %563
  %v567 = vrot.slane %v418, 2
  %568 = vrot.lane.b32.xlu0 %v567, 96
  %v569 = vpop.permute.xlu0 %568
  %v571 = vrot.slane %v418, 4
  %v572 = vsel %vm196, %v413, %v554
  %v573 = vsel %vm439, %v572, %v557
  %v574 = vsel %vm441, %v573, %v532
  %v575 = vsel %vm196, %v560, %v564
  %v576 = vsel %vm439, %v575, %v540
  %v577 = vsel %vm441, %v576, %v569
  %578 = vrot.lane.b32.xlu0 %v416, 96
  %v579 = vpop.permute.xlu0 %578
  %581 = vrot.lane.b32.xlu0 %v418, 64
  %v582 = vpop.permute.xlu0 %581
  %v584 = vsel %vm196, %v414, %v554
  %v585 = vsel %vm439, %v584, %v557
  %v586 = vsel %vm441, %v585, %v579
  %v587 = vsel %vm439, %v575, %v582
  %v588 = vsel %vm441, %v587, %v569
  %589 = vrot.lane.b32.xlu0 %v417, 32
  %v590 = vpop.permute.xlu0 %589
  %592 = vrot.lane.b32.xlu0 %v517, 64
  %v593 = vpop.permute.xlu0 %592
  %v596 = vrot.slane %v419, 2
  %597 = vrot.lane.b32.xlu0 %v596, 32
  %v598 = vpop.permute.xlu0 %597
  %601 = vrot.lane.b32.xlu0 %v421, 96
  %v602 = vpop.permute.xlu0 %601
  %v604 = vrot.slane %v421, 2
  %v606 = vsel %vm196, 0.0, %v590
  %v607 = vsel %vm439, %v606, %v593
  %v608 = vsel %vm441, %v607, 0.0
  %v609 = vsel %vm196, %v419, %v598
  %v610 = vsel %vm439, %v609, 0.0
  %v611 = vsel %vm441, %v610, %v602
  %612 = vrot.lane.b32.xlu0 %v517, 32
  %v613 = vpop.permute.xlu0 %612
  %615 = vrot.lane.b32.xlu0 %v545, 64
  %v616 = vpop.permute.xlu0 %615
  %618 = vrot.lane.b32.xlu0 %v419, 96
  %v619 = vpop.permute.xlu0 %618
  %v622 = vrot.slane %v419, 4
  %623 = vrot.lane.b32.xlu0 %v622, 32
  %v624 = vpop.permute.xlu0 %623
  %626 = vrot.lane.b32.xlu0 %v421, 64
  %v627 = vpop.permute.xlu0 %626
  %629 = vrot.lane.b32.xlu0 %v604, 96
  %v630 = vpop.permute.xlu0 %629
  %v632 = vrot.slane %v421, 4
  %v634 = vsel %vm196, %v417, %v613
  %v635 = vsel %vm439, %v634, %v616
  %v636 = vsel %vm441, %v635, %v619
  %v637 = vsel %vm196, %v596, %v624
  %v638 = vsel %vm439, %v637, %v627
  %v639 = vsel %vm441, %v638, %v630
  %640 = vrot.lane.b32.xlu0 %v567, 32
  %v641 = vpop.permute.xlu0 %640
  %643 = vrot.lane.b32.xlu0 %v571, 64
  %v644 = vpop.permute.xlu0 %643
  %v647 = vrot.slane %v420, 2
  %v649 = vrot.slane %v420, 4
  %650 = vrot.lane.b32.xlu0 %v649, 32
  %v651 = vpop.permute.xlu0 %650
  %v654 = vrot.slane %v422, 2
  %655 = vrot.lane.b32.xlu0 %v654, 96
  %v656 = vpop.permute.xlu0 %655
  %v658 = vrot.slane %v422, 4
  %v659 = vsel %vm196, %v417, %v641
  %v660 = vsel %vm439, %v659, %v644
  %v661 = vsel %vm441, %v660, %v619
  %v662 = vsel %vm196, %v647, %v651
  %v663 = vsel %vm439, %v662, %v627
  %v664 = vsel %vm441, %v663, %v656
  %665 = vrot.lane.b32.xlu0 %v420, 96
  %v666 = vpop.permute.xlu0 %665
  %668 = vrot.lane.b32.xlu0 %v422, 64
  %v669 = vpop.permute.xlu0 %668
  %v671 = vsel %vm196, %v418, %v641
  %v672 = vsel %vm439, %v671, %v644
  %v673 = vsel %vm441, %v672, %v666
  %v674 = vsel %vm439, %v662, %v669
  %v675 = vsel %vm441, %v674, %v656
  %676 = vrot.lane.b32.xlu0 %v421, 32
  %v677 = vpop.permute.xlu0 %676
  %679 = vrot.lane.b32.xlu0 %v604, 64
  %v680 = vpop.permute.xlu0 %679
  %v683 = vrot.slane %v423, 2
  %684 = vrot.lane.b32.xlu0 %v683, 32
  %v685 = vpop.permute.xlu0 %684
  %688 = vrot.lane.b32.xlu0 %v425, 96
  %v689 = vpop.permute.xlu0 %688
  %v691 = vrot.slane %v425, 2
  %v693 = vsel %vm196, 0.0, %v677
  %v694 = vsel %vm439, %v693, %v680
  %v695 = vsel %vm441, %v694, 0.0
  %v696 = vsel %vm196, %v423, %v685
  %v697 = vsel %vm439, %v696, 0.0
  %v698 = vsel %vm441, %v697, %v689
  %699 = vrot.lane.b32.xlu0 %v604, 32
  %v700 = vpop.permute.xlu0 %699
  %702 = vrot.lane.b32.xlu0 %v632, 64
  %v703 = vpop.permute.xlu0 %702
  %705 = vrot.lane.b32.xlu0 %v423, 96
  %v706 = vpop.permute.xlu0 %705
  %v709 = vrot.slane %v423, 4
  %710 = vrot.lane.b32.xlu0 %v709, 32
  %v711 = vpop.permute.xlu0 %710
  %713 = vrot.lane.b32.xlu0 %v425, 64
  %v714 = vpop.permute.xlu0 %713
  %716 = vrot.lane.b32.xlu0 %v691, 96
  %v717 = vpop.permute.xlu0 %716
  %v719 = vrot.slane %v425, 4
  %v721 = vsel %vm196, %v421, %v700
  %v722 = vsel %vm439, %v721, %v703
  %v723 = vsel %vm441, %v722, %v706
  %v724 = vsel %vm196, %v683, %v711
  %v725 = vsel %vm439, %v724, %v714
  %v726 = vsel %vm441, %v725, %v717
  %727 = vrot.lane.b32.xlu0 %v654, 32
  %v728 = vpop.permute.xlu0 %727
  %730 = vrot.lane.b32.xlu0 %v658, 64
  %v731 = vpop.permute.xlu0 %730
  %v734 = vrot.slane %v424, 2
  %v736 = vrot.slane %v424, 4
  %737 = vrot.lane.b32.xlu0 %v736, 32
  %v738 = vpop.permute.xlu0 %737
  %v741 = vrot.slane %v426, 2
  %742 = vrot.lane.b32.xlu0 %v741, 96
  %v743 = vpop.permute.xlu0 %742
  %v745 = vrot.slane %v426, 4
  %v746 = vsel %vm196, %v421, %v728
  %v747 = vsel %vm439, %v746, %v731
  %v748 = vsel %vm441, %v747, %v706
  %v749 = vsel %vm196, %v734, %v738
  %v750 = vsel %vm439, %v749, %v714
  %v751 = vsel %vm441, %v750, %v743
  %752 = vrot.lane.b32.xlu0 %v424, 96
  %v753 = vpop.permute.xlu0 %752
  %755 = vrot.lane.b32.xlu0 %v426, 64
  %v756 = vpop.permute.xlu0 %755
  %v758 = vsel %vm196, %v422, %v728
  %v759 = vsel %vm439, %v758, %v731
  %v760 = vsel %vm441, %v759, %v753
  %v761 = vsel %vm439, %v749, %v756
  %v762 = vsel %vm441, %v761, %v743
  %v765 = vrot.slane %v460, 6
  %v766 = vrot.slane %v463, 6
  %v767 = vrot.slane %v459, 6
  %v773 = vrot.slane %v480, 4
  %v774 = vrot.slane %v483, 4
  %v775 = vrot.slane %v479, 4
  %v781 = vrot.slane %v501, 2
  %v782 = vrot.slane %v504, 2
  %v783 = vrot.slane %v500, 2
  %v789 = vrot.slane %v574, 2
  %v790 = vrot.slane %v577, 2
  %v791 = vrot.slane %v571, 2
  %v797 = vrot.slane %v586, 4
  %v798 = vrot.slane %v588, 4
  %v799 = vrot.slane %v571, 4
  %v805 = vrot.slane %v661, 2
  %v806 = vrot.slane %v664, 2
  %v807 = vrot.slane %v658, 2
  %v813 = vrot.slane %v673, 4
  %v814 = vrot.slane %v675, 4
  %v815 = vrot.slane %v658, 4
  %v821 = vrot.slane %v748, 2
  %v822 = vrot.slane %v751, 2
  %v823 = vrot.slane %v745, 2
  %v829 = vrot.slane %v760, 4
  %v830 = vrot.slane %v762, 4
  %v831 = vrot.slane %v745, 4
  %vm835 = vcmask 1041408
  %v836 = vsel %vm835, 0.0, %v765
  %v837 = vsel %vm835, %v442, %v766
  %v838 = vsel %vm835, %v436, %v767
  %vm839 = vcmask 1043456
  %v840 = vsel %vm839, %v836, %v773
  %v841 = vsel %vm839, %v837, %v774
  %v842 = vsel %vm839, %v838, %v775
  %vm843 = vcmask 1045504
  %v844 = vsel %vm843, %v840, %v781
  %v845 = vsel %vm843, %v841, %v782
  %v846 = vsel %vm843, %v842, %v783
  %v847 = vsel %vm835, %v521, %v549
  %v848 = vsel %vm835, %v524, %v552
  %v849 = vsel %vm835, %v517, %v545
  %v850 = vsel %vm839, %v847, %v789
  %v851 = vsel %vm839, %v848, %v790
  %v852 = vsel %vm839, %v849, %v791
  %v853 = vsel %vm843, %v850, %v797
  %v854 = vsel %vm843, %v851, %v798
  %v855 = vsel %vm843, %v852, %v799
  %v856 = vsel %vm835, %v608, %v636
  %v857 = vsel %vm835, %v611, %v639
  %v858 = vsel %vm835, %v604, %v632
  %v859 = vsel %vm839, %v856, %v805
  %v860 = vsel %vm839, %v857, %v806
  %v861 = vsel %vm839, %v858, %v807
  %v862 = vsel %vm843, %v859, %v813
  %v863 = vsel %vm843, %v860, %v814
  %v864 = vsel %vm843, %v861, %v815
  %v865 = vsel %vm835, %v695, %v723
  %v866 = vsel %vm835, %v698, %v726
  %v867 = vsel %vm835, %v691, %v719
  %v868 = vsel %vm839, %v865, %v821
  %v869 = vsel %vm839, %v866, %v822
  %v870 = vsel %vm839, %v867, %v823
  %v871 = vsel %vm843, %v868, %v829
  %v872 = vsel %vm843, %v869, %v830
  %v873 = vsel %vm843, %v870, %v831
  %v874 = vld [vmem:[%s5] sm:$0xff]
  %v875 = vld [vmem:[%s5 + $0x8] sm:$0xff]
  %v876 = vld [vmem:[%s5 + $0x10] sm:$0xff]
  %v877 = vld [vmem:[%s5 + $0x18] sm:$0xff]
  %v878 = vld [vmem:[%s5 + $0x20] sm:$0xff]
  %v879 = vld [vmem:[%s5 + $0x28] sm:$0xff]
  %v880 = vld [vmem:[%s5 + $0x30] sm:$0xff]
  %v881 = vld [vmem:[%s5 + $0x38] sm:$0xff]
  %v882 = vld [vmem:[%s5 + $0x40] sm:$0xff]
  %v883 = vld [vmem:[%s5 + $0x48] sm:$0xff]
  %v884 = vld [vmem:[%s5 + $0x50] sm:$0xff]
  %v885 = vld [vmem:[%s5 + $0x58] sm:$0xff]
  %v886 = vld [vmem:[%s5 + $0x60] sm:$0xff]
  %v887 = vld [vmem:[%s5 + $0x68] sm:$0xff]
  %v888 = vld [vmem:[%s5 + $0x70] sm:$0xff]
  %v889 = vld [vmem:[%s5 + $0x78] sm:$0xff]
  %v890 = vld [vmem:[%s5 + $0x80] sm:$0xff]
  %v891 = vld [vmem:[%s5 + $0x88] sm:$0xff]
  %v892 = vld [vmem:[%s5 + $0x90] sm:$0xff]
  %v893 = vld [vmem:[%s5 + $0x98] sm:$0xff]
  %v894 = vld [vmem:[%s5 + $0xa0] sm:$0xff]
  %v895 = vld [vmem:[%s5 + $0xa8] sm:$0xff]
  %v896 = vld [vmem:[%s5 + $0xb0] sm:$0xff]
  %v897 = vld [vmem:[%s5 + $0xb8] sm:$0xff]
  %v898 = vld [vmem:[%s5 + $0xc0] sm:$0xff]
  %v899 = vld [vmem:[%s5 + $0xc8] sm:$0xff]
  %v900 = vld [vmem:[%s5 + $0xd0] sm:$0xff]
  %v901 = vld [vmem:[%s5 + $0xd8] sm:$0xff]
  %v902 = vld [vmem:[%s5 + $0xe0] sm:$0xff]
  %v903 = vld [vmem:[%s5 + $0xe8] sm:$0xff]
  %v904 = vld [vmem:[%s5 + $0xf0] sm:$0xff]
  %v905 = vld [vmem:[%s5 + $0xf8] sm:$0xff]
  %v906 = vld [vmem:[%s5 + $0x100] sm:$0xff]
  %v907 = vld [vmem:[%s5 + $0x108] sm:$0xff]
  %v908 = vld [vmem:[%s5 + $0x110] sm:$0xff]
  %v909 = vld [vmem:[%s5 + $0x118] sm:$0xff]
  %v911 = vsel %vm196, %v846, 0
  %v914 = vsel %vm196, %v855, 0
  %v917 = vsel %vm196, %v864, 0
  %v920 = vsel %vm196, %v873, 0
  %922 = vmatpush.msra.mxu0 %v889
  %923 = vmatpush.msra.mxu0 %v888
  %924 = vmatpush.msra.mxu0 %v887
  %925 = vmatpush.msra.mxu0 %v886
  %926 = vmatpush.msra.mxu0 %v885
  %927 = vmatpush.msra.mxu0 %v884
  %928 = vmatpush.msra.mxu0 %v883
  %929 = vmatpush.msra.mxu0 %v882
  %930 = vmatpush.msra.mxu0 %v881
  %931 = vmatpush.msra.mxu0 %v880
  %932 = vmatpush.msra.mxu0 %v879
  %933 = vmatpush.msra.mxu0 %v878
  %934 = vmatpush.msra.mxu0 %v877
  %935 = vmatpush.msra.mxu0 %v876
  %936 = vmatpush.msra.mxu0 %v875
  %937 = vmatpush.msra.mxu0 %v874
  %938 = vmatmul.f32.gmra.mxu0 %v844
  %v939 = vpop.f32.mrf.mxu0
  %v940 = vadd.f32 0.0, %v939
  %941 = vmatmul.f32.gmra.mxu0 %v853
  %v942 = vpop.f32.mrf.mxu0
  %v943 = vadd.f32 0.0, %v942
  %944 = vmatmul.f32.gmra.mxu0 %v862
  %v945 = vpop.f32.mrf.mxu0
  %v946 = vadd.f32 0.0, %v945
  %947 = vmatmul.f32.gmra.mxu0 %v871
  %v948 = vpop.f32.mrf.mxu0
  %v949 = vadd.f32 0.0, %v948
  %950 = vdwg.mxu0
  %951 = vmatpush.msra.mxu0 %v905
  %952 = vmatpush.msra.mxu0 %v904
  %953 = vmatpush.msra.mxu0 %v903
  %954 = vmatpush.msra.mxu0 %v902
  %955 = vmatpush.msra.mxu0 %v901
  %956 = vmatpush.msra.mxu0 %v900
  %957 = vmatpush.msra.mxu0 %v899
  %958 = vmatpush.msra.mxu0 %v898
  %959 = vmatpush.msra.mxu0 %v897
  %960 = vmatpush.msra.mxu0 %v896
  %961 = vmatpush.msra.mxu0 %v895
  %962 = vmatpush.msra.mxu0 %v894
  %963 = vmatpush.msra.mxu0 %v893
  %964 = vmatpush.msra.mxu0 %v892
  %965 = vmatpush.msra.mxu0 %v891
  %966 = vmatpush.msra.mxu0 %v890
  %967 = vmatmul.f32.gmra.mxu0 %v845
  %v968 = vpop.f32.mrf.mxu0
  %v969 = vadd.f32 %v940, %v968
  %970 = vmatmul.f32.gmra.mxu0 %v854
  %v971 = vpop.f32.mrf.mxu0
  %v972 = vadd.f32 %v943, %v971
  %973 = vmatmul.f32.gmra.mxu0 %v863
  %v974 = vpop.f32.mrf.mxu0
  %v975 = vadd.f32 %v946, %v974
  %976 = vmatmul.f32.gmra.mxu0 %v872
  %v977 = vpop.f32.mrf.mxu0
  %v978 = vadd.f32 %v949, %v977
  %979 = vdwg.mxu0
  %980 = vmatpush.msra.mxu0 0.0
  %981 = vmatpush.msra.mxu0 0.0
  %982 = vmatpush.msra.mxu0 0.0
  %983 = vmatpush.msra.mxu0 0.0
  %984 = vmatpush.msra.mxu0 0.0
  %985 = vmatpush.msra.mxu0 0.0
  %986 = vmatpush.msra.mxu0 0.0
  %987 = vmatpush.msra.mxu0 0.0
  %988 = vmatpush.msra.mxu0 0.0
  %989 = vmatpush.msra.mxu0 0.0
  %990 = vmatpush.msra.mxu0 0.0
  %991 = vmatpush.msra.mxu0 0.0
  %992 = vmatpush.msra.mxu0 %v909
  %993 = vmatpush.msra.mxu0 %v908
  %994 = vmatpush.msra.mxu0 %v907
  %995 = vmatpush.msra.mxu0 %v906
  %996 = vmatmul.f32.gmra.mxu0 %v911
  %v997 = vpop.f32.mrf.mxu0
  %v998 = vadd.f32 %v969, %v997
  %999 = vmatmul.f32.gmra.mxu0 %v914
  %v1000 = vpop.f32.mrf.mxu0
  %v1001 = vadd.f32 %v972, %v1000
  %1002 = vmatmul.f32.gmra.mxu0 %v917
  %v1003 = vpop.f32.mrf.mxu0
  %v1004 = vadd.f32 %v975, %v1003
  %1005 = vmatmul.f32.gmra.mxu0 %v920
  %v1006 = vpop.f32.mrf.mxu0
  %v1007 = vadd.f32 %v978, %v1006
  %1008 = vdwg.mxu0
  %v1009 = vsel %vm439, %v998, 0.0
  %v1010 = vsel %vm439, %v1001, 0.0
  %v1011 = vadd.f32 %v1009, %v1010
  %v1012 = vsel %vm439, %v1004, 0.0
  %v1013 = vadd.f32 %v1011, %v1012
  %v1014 = vsel %vm439, %v1007, 0.0
  %v1015 = vadd.f32 %v1013, %v1014
  %v1016 = vrot.slane %v1015, 4
  %v1017 = vadd.f32 %v1015, %v1016
  %v1018 = vrot.slane %v1017, 2
  %v1019 = vadd.f32 %v1017, %v1018
  %v1020 = vrot.slane %v1019, 1
  %v1021 = vadd.f32 %v1019, %v1020
  %v1022 = vrcp.pop 32.0
  %v1023 = vmul.f32 32.0, %v1022
  %v1024 = vsub.f32 1.0, %v1023
  %v1025 = vmul.f32 %v1022, %v1024
  %v1026 = vadd.f32 %v1022, %v1025
  %vm1027 = vweird.f32 %v1022
  %v1028 = vsel %vm1027, %v1022, %v1026
  %v1029 = vmul.f32 %v1021, %v1028
  %v1030 = vsub.f32 %v998, %v1029
  %v1031 = vsub.f32 %v1001, %v1029
  %v1032 = vsub.f32 %v1004, %v1029
  %v1033 = vsub.f32 %v1007, %v1029
  %v1034 = vmul.f32 %v1030, %v1030
  %v1035 = vmul.f32 %v1031, %v1031
  %v1036 = vmul.f32 %v1032, %v1032
  %v1037 = vmul.f32 %v1033, %v1033
  %v1038 = vsel %vm439, %v1034, 0.0
  %v1039 = vsel %vm439, %v1035, 0.0
  %v1040 = vadd.f32 %v1038, %v1039
  %v1041 = vsel %vm439, %v1036, 0.0
  %v1042 = vadd.f32 %v1040, %v1041
  %v1043 = vsel %vm439, %v1037, 0.0
  %v1044 = vadd.f32 %v1042, %v1043
  %v1045 = vrot.slane %v1044, 4
  %v1046 = vadd.f32 %v1044, %v1045
  %v1047 = vrot.slane %v1046, 2
  %v1048 = vadd.f32 %v1046, %v1047
  %v1049 = vrot.slane %v1048, 1
  %v1050 = vadd.f32 %v1048, %v1049
  %v1051 = vmul.f32 %v1050, %v1028
  %v1052 = vadd.f32 %v1051, 1e-05
  %v1053 = vrsqrt.pop %v1052
  %v1054 = vmul.f32 %v1053, %v1052
  %v1055 = vmul.f32 %v1054, %v1053
  %v1056 = vmul.f32 0.5, %v1055
  %v1057 = vsub.f32 1.5, %v1056
  %v1058 = vmul.f32 %v1053, %v1057
  %vm1059 = vweird.f32 %v1052
  %vm1060 = vweird.f32 %v1053
  %vm1061 = vmor %vm1059, %vm1060
  %v1062 = vsel %vm1061, %v1053, %v1058
  %v1063 = vmul.f32 %v1030, %v1062
  %v1064 = vmul.f32 %v1031, %v1062
  %v1065 = vmul.f32 %v1032, %v1062
  %v1066 = vmul.f32 %v1033, %v1062
  %v1067 = vld [vmem:[%s6] sm:$0x1]
  %v1069 = vperm.slane %v1067, 0
  %v1071 = vmul.f32 %v1063, %v1069
  %v1072 = vmul.f32 %v1064, %v1069
  %v1073 = vmul.f32 %v1065, %v1069
  %v1074 = vmul.f32 %v1066, %v1069
  %v1075 = vld [vmem:[%s7] sm:$0x1]
  %v1077 = vperm.slane %v1075, 0
  %v1079 = vadd.f32 %v1071, %v1077
  %v1080 = vadd.f32 %v1072, %v1077
  %v1081 = vadd.f32 %v1073, %v1077
  %v1082 = vadd.f32 %v1074, %v1077
  %vm1083 = vcmp.gt.f32.partialorder %v1079, 0.0
  %vm1084 = vcmp.gt.f32.partialorder %v1080, 0.0
  %vm1085 = vcmp.gt.f32.partialorder %v1081, 0.0
  %vm1086 = vcmp.gt.f32.partialorder %v1082, 0.0
  %v1087 = vmul.f32 %v1079, 0.2
  %v1088 = vmul.f32 %v1080, 0.2
  %v1089 = vmul.f32 %v1081, 0.2
  %v1090 = vmul.f32 %v1082, 0.2
  %v1091 = vsel %vm1083, %v1079, %v1087
  %v1092 = vsel %vm1084, %v1080, %v1088
  %v1093 = vsel %vm1085, %v1081, %v1089
  %v1094 = vsel %vm1086, %v1082, %v1090
  %v1096 = vrot.slane %v1091, 2
  %1097 = vrot.lane.b32.xlu0 %v1096, 64
  %v1098 = vpop.permute.xlu0 %1097
  %1101 = vrot.lane.b32.xlu0 %v1092, 64
  %v1102 = vpop.permute.xlu0 %1101
  %v1104 = vrot.slane %v1092, 2
  %v1106 = vsel %vm439, %v1091, %v1098
  %v1107 = vsel %vm439, 0.0, %v1102
  %v1108 = vrot.slane %v1091, 4
  %v1110 = vrot.slane %v1091, 6
  %1111 = vrot.lane.b32.xlu0 %v1110, 64
  %v1112 = vpop.permute.xlu0 %1111
  %v1114 = vrot.slane %v1092, 4
  %1115 = vrot.lane.b32.xlu0 %v1114, 64
  %v1116 = vpop.permute.xlu0 %1115
  %v1118 = vrot.slane %v1092, 6
  %v1119 = vsel %vm439, 0.0, %v1098
  %v1120 = vsel %vm439, %v1108, %v1112
  %v1121 = vsel %vm439, %v1104, %v1116
  %v1123 = vrot.slane %v1093, 2
  %1124 = vrot.lane.b32.xlu0 %v1123, 64
  %v1125 = vpop.permute.xlu0 %1124
  %1128 = vrot.lane.b32.xlu0 %v1094, 64
  %v1129 = vpop.permute.xlu0 %1128
  %v1131 = vrot.slane %v1094, 2
  %v1132 = vsel %vm439, %v1104, 0.0
  %v1133 = vsel %vm439, %v1093, %v1125
  %v1134 = vsel %vm439, 0.0, %v1129
  %1135 = vrot.lane.b32.xlu0 %v1104, 64
  %v1136 = vpop.permute.xlu0 %1135
  %1139 = vrot.lane.b32.xlu0 %v1093, 64
  %v1140 = vpop.permute.xlu0 %1139
  %v1143 = vrot.slane %v1093, 4
  %1144 = vrot.lane.b32.xlu0 %v1143, 64
  %v1145 = vpop.permute.xlu0 %1144
  %1147 = vrot.lane.b32.xlu0 %v1131, 64
  %v1148 = vpop.permute.xlu0 %1147
  %v1150 = vrot.slane %v1094, 4
  %v1151 = vsel %vm439, %v1092, %v1136
  %v1152 = vsel %vm439, %v1114, %v1140
  %v1153 = vsel %vm439, %v1123, %v1145
  %v1154 = vsel %vm439, %v1094, %v1148
  %v1159 = vrot.slane 0.0, 6
  %v1160 = vrot.slane %v1119, 6
  %v1161 = vrot.slane %v1120, 6
  %v1162 = vrot.slane %v1121, 6
  %v1163 = vrot.slane %v1118, 6
  %v1173 = vrot.slane %v1107, 4
  %v1174 = vrot.slane %v1132, 4
  %v1175 = vrot.slane %v1133, 4
  %v1176 = vrot.slane %v1134, 4
  %v1177 = vrot.slane %v1131, 4
  %v1187 = vrot.slane %v1151, 4
  %v1188 = vrot.slane %v1152, 4
  %v1189 = vrot.slane %v1153, 4
  %v1190 = vrot.slane %v1154, 4
  %v1191 = vrot.slane %v1150, 4
  %v1197 = vsel %vm835, 0.0, %v1159
  %v1198 = vsel %vm835, 0.0, %v1160
  %v1199 = vsel %vm835, %v1106, %v1161
  %v1200 = vsel %vm835, %v1107, %v1162
  %v1201 = vsel %vm835, %v1104, %v1163
  %v1202 = vsel %vm839, %v1197, %v1173
  %v1203 = vsel %vm839, %v1198, %v1174
  %v1204 = vsel %vm839, %v1199, %v1175
  %v1205 = vsel %vm839, %v1200, %v1176
  %v1206 = vsel %vm839, %v1201, %v1177
  %v1207 = vsel %vm843, %v1202, %v1187
  %v1208 = vsel %vm843, %v1203, %v1188
  %v1209 = vsel %vm843, %v1204, %v1189
  %v1210 = vsel %vm843, %v1205, %v1190
  %v1211 = vsel %vm843, %v1206, %v1191
  %v1212 = vld [vmem:[%s8] sm:$0xff]
  %v1213 = vld [vmem:[%s8 + $0x8] sm:$0xff]
  %v1214 = vld [vmem:[%s8 + $0x10] sm:$0xff]
  %v1215 = vld [vmem:[%s8 + $0x18] sm:$0xff]
  %v1216 = vld [vmem:[%s8 + $0x20] sm:$0xff]
  %v1217 = vld [vmem:[%s8 + $0x28] sm:$0xff]
  %v1218 = vld [vmem:[%s8 + $0x30] sm:$0xff]
  %v1219 = vld [vmem:[%s8 + $0x38] sm:$0xff]
  %v1220 = vld [vmem:[%s8 + $0x40] sm:$0xff]
  %v1221 = vld [vmem:[%s8 + $0x48] sm:$0xff]
  %v1222 = vld [vmem:[%s8 + $0x50] sm:$0xff]
  %v1223 = vld [vmem:[%s8 + $0x58] sm:$0xff]
  %v1224 = vld [vmem:[%s8 + $0x60] sm:$0xff]
  %v1225 = vld [vmem:[%s8 + $0x68] sm:$0xff]
  %v1226 = vld [vmem:[%s8 + $0x70] sm:$0xff]
  %v1227 = vld [vmem:[%s8 + $0x78] sm:$0xff]
  %v1228 = vld [vmem:[%s8 + $0x80] sm:$0xff]
  %v1229 = vld [vmem:[%s8 + $0x88] sm:$0xff]
  %v1230 = vld [vmem:[%s8 + $0x90] sm:$0xff]
  %v1231 = vld [vmem:[%s8 + $0x98] sm:$0xff]
  %v1232 = vld [vmem:[%s8 + $0xa0] sm:$0xff]
  %v1233 = vld [vmem:[%s8 + $0xa8] sm:$0xff]
  %v1234 = vld [vmem:[%s8 + $0xb0] sm:$0xff]
  %v1235 = vld [vmem:[%s8 + $0xb8] sm:$0xff]
  %v1236 = vld [vmem:[%s8 + $0xc0] sm:$0xff]
  %v1237 = vld [vmem:[%s8 + $0xc8] sm:$0xff]
  %v1238 = vld [vmem:[%s8 + $0xd0] sm:$0xff]
  %v1239 = vld [vmem:[%s8 + $0xd8] sm:$0xff]
  %v1240 = vld [vmem:[%s8 + $0xe0] sm:$0xff]
  %v1241 = vld [vmem:[%s8 + $0xe8] sm:$0xff]
  %v1242 = vld [vmem:[%s8 + $0xf0] sm:$0xff]
  %v1243 = vld [vmem:[%s8 + $0xf8] sm:$0xff]
  %v1244 = vld [vmem:[%s8 + $0x100] sm:$0xff]
  %v1245 = vld [vmem:[%s8 + $0x108] sm:$0xff]
  %v1246 = vld [vmem:[%s8 + $0x110] sm:$0xff]
  %v1247 = vld [vmem:[%s8 + $0x118] sm:$0xff]
  %v1248 = vld [vmem:[%s8 + $0x120] sm:$0xff]
  %v1249 = vld [vmem:[%s8 + $0x128] sm:$0xff]
  %v1250 = vld [vmem:[%s8 + $0x130] sm:$0xff]
  %v1251 = vld [vmem:[%s8 + $0x138] sm:$0xff]
  %v1252 = vld [vmem:[%s8 + $0x140] sm:$0xff]
  %v1253 = vld [vmem:[%s8 + $0x148] sm:$0xff]
  %v1254 = vld [vmem:[%s8 + $0x150] sm:$0xff]
  %v1255 = vld [vmem:[%s8 + $0x158] sm:$0xff]
  %v1256 = vld [vmem:[%s8 + $0x160] sm:$0xff]
  %v1257 = vld [vmem:[%s8 + $0x168] sm:$0xff]
  %v1258 = vld [vmem:[%s8 + $0x170] sm:$0xff]
  %v1259 = vld [vmem:[%s8 + $0x178] sm:$0xff]
  %v1260 = vld [vmem:[%s8 + $0x180] sm:$0xff]
  %v1261 = vld [vmem:[%s8 + $0x188] sm:$0xff]
  %v1262 = vld [vmem:[%s8 + $0x190] sm:$0xff]
  %v1263 = vld [vmem:[%s8 + $0x198] sm:$0xff]
  %v1264 = vld [vmem:[%s8 + $0x1a0] sm:$0xff]
  %v1265 = vld [vmem:[%s8 + $0x1a8] sm:$0xff]
  %v1266 = vld [vmem:[%s8 + $0x1b0] sm:$0xff]
  %v1267 = vld [vmem:[%s8 + $0x1b8] sm:$0xff]
  %v1268 = vld [vmem:[%s8 + $0x1c0] sm:$0xff]
  %v1269 = vld [vmem:[%s8 + $0x1c8] sm:$0xff]
  %v1270 = vld [vmem:[%s8 + $0x1d0] sm:$0xff]
  %v1271 = vld [vmem:[%s8 + $0x1d8] sm:$0xff]
  %v1272 = vld [vmem:[%s8 + $0x1e0] sm:$0xff]
  %v1273 = vld [vmem:[%s8 + $0x1e8] sm:$0xff]
  %v1274 = vld [vmem:[%s8 + $0x1f0] sm:$0xff]
  %v1275 = vld [vmem:[%s8 + $0x1f8] sm:$0xff]
  %v1276 = vld [vmem:[%s8 + $0x200] sm:$0xff]
  %v1277 = vld [vmem:[%s8 + $0x208] sm:$0xff]
  %v1278 = vld [vmem:[%s8 + $0x210] sm:$0xff]
  %v1279 = vld [vmem:[%s8 + $0x218] sm:$0xff]
  %v1280 = vld [vmem:[%s8 + $0x220] sm:$0xff]
  %v1281 = vld [vmem:[%s8 + $0x228] sm:$0xff]
  %v1282 = vld [vmem:[%s8 + $0x230] sm:$0xff]
  %v1283 = vld [vmem:[%s8 + $0x238] sm:$0xff]
  %v1285 = vsel %vm439, %v1211, 0
  %1287 = vmatpush.msra.mxu0 %v1227
  %1288 = vmatpush.msra.mxu0 %v1226
  %1289 = vmatpush.msra.mxu0 %v1225
  %1290 = vmatpush.msra.mxu0 %v1224
  %1291 = vmatpush.msra.mxu0 %v1223
  %1292 = vmatpush.msra.mxu0 %v1222
  %1293 = vmatpush.msra.mxu0 %v1221
  %1294 = vmatpush.msra.mxu0 %v1220
  %1295 = vmatpush.msra.mxu0 %v1219
  %1296 = vmatpush.msra.mxu0 %v1218
  %1297 = vmatpush.msra.mxu0 %v1217
  %1298 = vmatpush.msra.mxu0 %v1216
  %1299 = vmatpush.msra.mxu0 %v1215
  %1300 = vmatpush.msra.mxu0 %v1214
  %1301 = vmatpush.msra.mxu0 %v1213
  %1302 = vmatpush.msra.mxu0 %v1212
  %1303 = vmatmul.f32.gmra.mxu0 %v1207
  %v1304 = vpop.f32.mrf.mxu0
  %v1305 = vadd.f32 0.0, %v1304
  %1306 = vdwg.mxu0
  %1307 = vmatpush.msra.mxu0 %v1243
  %1308 = vmatpush.msra.mxu0 %v1242
  %1309 = vmatpush.msra.mxu0 %v1241
  %1310 = vmatpush.msra.mxu0 %v1240
  %1311 = vmatpush.msra.mxu0 %v1239
  %1312 = vmatpush.msra.mxu0 %v1238
  %1313 = vmatpush.msra.mxu0 %v1237
  %1314 = vmatpush.msra.mxu0 %v1236
  %1315 = vmatpush.msra.mxu0 %v1235
  %1316 = vmatpush.msra.mxu0 %v1234
  %1317 = vmatpush.msra.mxu0 %v1233
  %1318 = vmatpush.msra.mxu0 %v1232
  %1319 = vmatpush.msra.mxu0 %v1231
  %1320 = vmatpush.msra.mxu0 %v1230
  %1321 = vmatpush.msra.mxu0 %v1229
  %1322 = vmatpush.msra.mxu0 %v1228
  %1323 = vmatmul.f32.gmra.mxu0 %v1208
  %v1324 = vpop.f32.mrf.mxu0
  %v1325 = vadd.f32 %v1305, %v1324
  %1326 = vdwg.mxu0
  %1327 = vmatpush.msra.mxu0 %v1259
  %1328 = vmatpush.msra.mxu0 %v1258
  %1329 = vmatpush.msra.mxu0 %v1257
  %1330 = vmatpush.msra.mxu0 %v1256
  %1331 = vmatpush.msra.mxu0 %v1255
  %1332 = vmatpush.msra.mxu0 %v1254
  %1333 = vmatpush.msra.mxu0 %v1253
  %1334 = vmatpush.msra.mxu0 %v1252
  %1335 = vmatpush.msra.mxu0 %v1251
  %1336 = vmatpush.msra.mxu0 %v1250
  %1337 = vmatpush.msra.mxu0 %v1249
  %1338 = vmatpush.msra.mxu0 %v1248
  %1339 = vmatpush.msra.mxu0 %v1247
  %1340 = vmatpush.msra.mxu0 %v1246
  %1341 = vmatpush.msra.mxu0 %v1245
  %1342 = vmatpush.msra.mxu0 %v1244
  %1343 = vmatmul.f32.gmra.mxu0 %v1209
  %v1344 = vpop.f32.mrf.mxu0
  %v1345 = vadd.f32 %v1325, %v1344
  %1346 = vdwg.mxu0
  %1347 = vmatpush.msra.mxu0 %v1275
  %1348 = vmatpush.msra.mxu0 %v1274
  %1349 = vmatpush.msra.mxu0 %v1273
  %1350 = vmatpush.msra.mxu0 %v1272
  %1351 = vmatpush.msra.mxu0 %v1271
  %1352 = vmatpush.msra.mxu0 %v1270
  %1353 = vmatpush.msra.mxu0 %v1269
  %1354 = vmatpush.msra.mxu0 %v1268
  %1355 = vmatpush.msra.mxu0 %v1267
  %1356 = vmatpush.msra.mxu0 %v1266
  %1357 = vmatpush.msra.mxu0 %v1265
  %1358 = vmatpush.msra.mxu0 %v1264
  %1359 = vmatpush.msra.mxu0 %v1263
  %1360 = vmatpush.msra.mxu0 %v1262
  %1361 = vmatpush.msra.mxu0 %v1261
  %1362 = vmatpush.msra.mxu0 %v1260
  %1363 = vmatmul.f32.gmra.mxu0 %v1210
  %v1364 = vpop.f32.mrf.mxu0
  %v1365 = vadd.f32 %v1345, %v1364
  %1366 = vdwg.mxu0
  %1367 = vmatpush.msra.mxu0 0.0
  %1368 = vmatpush.msra.mxu0 0.0
  %1369 = vmatpush.msra.mxu0 0.0
  %1370 = vmatpush.msra.mxu0 0.0
  %1371 = vmatpush.msra.mxu0 0.0
  %1372 = vmatpush.msra.mxu0 0.0
  %1373 = vmatpush.msra.mxu0 0.0
  %1374 = vmatpush.msra.mxu0 0.0
  %1375 = vmatpush.msra.mxu0 %v1283
  %1376 = vmatpush.msra.mxu0 %v1282
  %1377 = vmatpush.msra.mxu0 %v1281
  %1378 = vmatpush.msra.mxu0 %v1280
  %1379 = vmatpush.msra.mxu0 %v1279
  %1380 = vmatpush.msra.mxu0 %v1278
  %1381 = vmatpush.msra.mxu0 %v1277
  %1382 = vmatpush.msra.mxu0 %v1276
  %1383 = vmatmul.f32.gmra.mxu0 %v1285
  %v1384 = vpop.f32.mrf.mxu0
  %v1385 = vadd.f32 %v1365, %v1384
  %1386 = vdwg.mxu0
  %v1387 = vrot.slane %v1385, 4
  %v1388 = vadd.f32 %v1385, %v1387
  %v1389 = vrot.slane %v1388, 2
  %v1390 = vadd.f32 %v1388, %v1389
  %v1391 = vrot.slane %v1390, 1
  %v1392 = vadd.f32 %v1390, %v1391
  %v1393 = vrcp.pop 8.0
  %v1394 = vmul.f32 8.0, %v1393
  %v1395 = vsub.f32 1.0, %v1394
  %v1396 = vmul.f32 %v1393, %v1395
  %v1397 = vadd.f32 %v1393, %v1396
  %vm1398 = vweird.f32 %v1393
  %v1399 = vsel %vm1398, %v1393, %v1397
  %v1400 = vmul.f32 %v1392, %v1399
  %v1401 = vsub.f32 %v1385, %v1400
  %v1402 = vmul.f32 %v1401, %v1401
  %v1403 = vrot.slane %v1402, 4
  %v1404 = vadd.f32 %v1402, %v1403
  %v1405 = vrot.slane %v1404, 2
  %v1406 = vadd.f32 %v1404, %v1405
  %v1407 = vrot.slane %v1406, 1
  %v1408 = vadd.f32 %v1406, %v1407
  %v1409 = vmul.f32 %v1408, %v1399
  %v1410 = vadd.f32 %v1409, 1e-05
  %v1411 = vrsqrt.pop %v1410
  %v1412 = vmul.f32 %v1411, %v1410
  %v1413 = vmul.f32 %v1412, %v1411
  %v1414 = vmul.f32 0.5, %v1413
  %v1415 = vsub.f32 1.5, %v1414
  %v1416 = vmul.f32 %v1411, %v1415
  %vm1417 = vweird.f32 %v1410
  %vm1418 = vweird.f32 %v1411
  %vm1419 = vmor %vm1417, %vm1418
  %v1420 = vsel %vm1419, %v1411, %v1416
  %v1421 = vmul.f32 %v1401, %v1420
  %v1422 = vld [vmem:[%s9] sm:$0x1]
  %v1424 = vperm.slane %v1422, 0
  %v1426 = vmul.f32 %v1421, %v1424
  %v1427 = vld [vmem:[%s10] sm:$0x1]
  %v1429 = vperm.slane %v1427, 0
  %v1431 = vadd.f32 %v1426, %v1429
  %vm1432 = vcmp.gt.f32.partialorder %v1431, 0.0
  %v1433 = vmul.f32 %v1431, 0.2
  %v1434 = vsel %vm1432, %v1431, %v1433
  %v1435 = vld [vmem:[%s1] sm:$0x3]
  %v1437 = vrot.slane %v1434, 2
  %v1439 = vrot.slane %v1434, 4
  %v1441 = vrot.slane %v1434, 6
  %v1443 = vld [vmem:[%s11] sm:$0xff]
  %v1444 = vld [vmem:[%s11 + $0x8] sm:$0xff]
  %v1445 = vld [vmem:[%s11 + $0x10] sm:$0xff]
  %v1446 = vld [vmem:[%s11 + $0x18] sm:$0xff]
  %v1447 = vld [vmem:[%s11 + $0x20] sm:$0xff]
  %v1448 = vld [vmem:[%s11 + $0x28] sm:$0xff]
  %v1449 = vld [vmem:[%s11 + $0x30] sm:$0xff]
  %v1450 = vld [vmem:[%s11 + $0x38] sm:$0xff]
  %v1451 = vld [vmem:[%s11 + $0x40] sm:$0xff]
  %v1452 = vld [vmem:[%s11 + $0x48] sm:$0xff]
  %v1453 = vld [vmem:[%s11 + $0x50] sm:$0xff]
  %v1454 = vld [vmem:[%s11 + $0x58] sm:$0xff]
  %v1455 = vld [vmem:[%s11 + $0x60] sm:$0xff]
  %v1456 = vld [vmem:[%s11 + $0x68] sm:$0xff]
  %v1457 = vld [vmem:[%s11 + $0x70] sm:$0xff]
  %v1458 = vld [vmem:[%s11 + $0x78] sm:$0xff]
  %v1459 = vld [vmem:[%s11 + $0x80] sm:$0xff]
  %v1460 = vld [vmem:[%s11 + $0x88] sm:$0xff]
  %v1461 = vld [vmem:[%s11 + $0x90] sm:$0xff]
  %v1462 = vld [vmem:[%s11 + $0x98] sm:$0xff]
  %v1463 = vld [vmem:[%s11 + $0xa0] sm:$0xff]
  %v1464 = vld [vmem:[%s11 + $0xa8] sm:$0xff]
  %v1465 = vld [vmem:[%s11 + $0xb0] sm:$0xff]
  %v1466 = vld [vmem:[%s11 + $0xb8] sm:$0xff]
  %v1467 = vld [vmem:[%s11 + $0xc0] sm:$0xff]
  %v1468 = vld [vmem:[%s11 + $0xc8] sm:$0xff]
  %v1469 = vld [vmem:[%s11 + $0xd0] sm:$0xff]
  %v1470 = vld [vmem:[%s11 + $0xd8] sm:$0xff]
  %v1471 = vld [vmem:[%s11 + $0xe0] sm:$0xff]
  %v1472 = vld [vmem:[%s11 + $0xe8] sm:$0xff]
  %v1473 = vld [vmem:[%s11 + $0xf0] sm:$0xff]
  %v1474 = vld [vmem:[%s11 + $0xf8] sm:$0xff]
  %v1475 = vld [vmem:[%s11 + $0x100] sm:$0xff]
  %v1476 = vld [vmem:[%s11 + $0x108] sm:$0xff]
  %v1477 = vld [vmem:[%s11 + $0x110] sm:$0xff]
  %v1478 = vld [vmem:[%s11 + $0x118] sm:$0xff]
  %v1479 = vld [vmem:[%s11 + $0x120] sm:$0xff]
  %v1480 = vld [vmem:[%s11 + $0x128] sm:$0xff]
  %v1481 = vld [vmem:[%s11 + $0x130] sm:$0xff]
  %v1482 = vld [vmem:[%s11 + $0x138] sm:$0xff]
  %v1483 = vld [vmem:[%s11 + $0x140] sm:$0xff]
  %v1484 = vld [vmem:[%s11 + $0x148] sm:$0xff]
  %v1485 = vld [vmem:[%s11 + $0x150] sm:$0xff]
  %v1486 = vld [vmem:[%s11 + $0x158] sm:$0xff]
  %v1487 = vld [vmem:[%s11 + $0x160] sm:$0xff]
  %v1488 = vld [vmem:[%s11 + $0x168] sm:$0xff]
  %v1489 = vld [vmem:[%s11 + $0x170] sm:$0xff]
  %v1490 = vld [vmem:[%s11 + $0x178] sm:$0xff]
  %v1491 = vld [vmem:[%s11 + $0x180] sm:$0xff]
  %v1492 = vld [vmem:[%s11 + $0x188] sm:$0xff]
  %v1493 = vld [vmem:[%s11 + $0x190] sm:$0xff]
  %v1494 = vld [vmem:[%s11 + $0x198] sm:$0xff]
  %v1495 = vld [vmem:[%s11 + $0x1a0] sm:$0xff]
  %v1496 = vld [vmem:[%s11 + $0x1a8] sm:$0xff]
  %v1497 = vld [vmem:[%s11 + $0x1b0] sm:$0xff]
  %v1498 = vld [vmem:[%s11 + $0x1b8] sm:$0xff]
  %v1499 = vld [vmem:[%s11 + $0x1c0] sm:$0xff]
  %v1500 = vld [vmem:[%s11 + $0x1c8] sm:$0xff]
  %v1501 = vld [vmem:[%s11 + $0x1d0] sm:$0xff]
  %v1502 = vld [vmem:[%s11 + $0x1d8] sm:$0xff]
  %v1503 = vld [vmem:[%s11 + $0x1e0] sm:$0xff]
  %v1504 = vld [vmem:[%s11 + $0x1e8] sm:$0xff]
  %v1505 = vld [vmem:[%s11 + $0x1f0] sm:$0xff]
  %v1506 = vld [vmem:[%s11 + $0x1f8] sm:$0xff]
  %v1507 = vld [vmem:[%s11 + $0x200] sm:$0xff]
  %v1508 = vld [vmem:[%s11 + $0x208] sm:$0xff]
  %v1509 = vld [vmem:[%s11 + $0x210] sm:$0xff]
  %v1510 = vld [vmem:[%s11 + $0x218] sm:$0xff]
  %v1511 = vld [vmem:[%s11 + $0x220] sm:$0xff]
  %v1512 = vld [vmem:[%s11 + $0x228] sm:$0xff]
  %v1513 = vld [vmem:[%s11 + $0x230] sm:$0xff]
  %v1514 = vld [vmem:[%s11 + $0x238] sm:$0xff]
  %v1515 = vld [vmem:[%s11 + $0x240] sm:$0xff]
  %v1516 = vld [vmem:[%s11 + $0x248] sm:$0xff]
  %v1517 = vld [vmem:[%s11 + $0x250] sm:$0xff]
  %v1518 = vld [vmem:[%s11 + $0x258] sm:$0xff]
  %v1519 = vld [vmem:[%s11 + $0x260] sm:$0xff]
  %v1520 = vld [vmem:[%s11 + $0x268] sm:$0xff]
  %v1521 = vld [vmem:[%s11 + $0x270] sm:$0xff]
  %v1522 = vld [vmem:[%s11 + $0x278] sm:$0xff]
  %v1523 = vld [vmem:[%s11 + $0x280] sm:$0xff]
  %v1524 = vld [vmem:[%s11 + $0x288] sm:$0xff]
  %v1525 = vld [vmem:[%s11 + $0x290] sm:$0xff]
  %v1526 = vld [vmem:[%s11 + $0x298] sm:$0xff]
  %v1527 = vld [vmem:[%s11 + $0x2a0] sm:$0xff]
  %v1528 = vld [vmem:[%s11 + $0x2a8] sm:$0xff]
  %v1529 = vld [vmem:[%s11 + $0x2b0] sm:$0xff]
  %v1530 = vld [vmem:[%s11 + $0x2b8] sm:$0xff]
  %v1531 = vld [vmem:[%s11 + $0x2c0] sm:$0xff]
  %v1532 = vld [vmem:[%s11 + $0x2c8] sm:$0xff]
  %v1533 = vld [vmem:[%s11 + $0x2d0] sm:$0xff]
  %v1534 = vld [vmem:[%s11 + $0x2d8] sm:$0xff]
  %v1535 = vld [vmem:[%s11 + $0x2e0] sm:$0xff]
  %v1536 = vld [vmem:[%s11 + $0x2e8] sm:$0xff]
  %v1537 = vld [vmem:[%s11 + $0x2f0] sm:$0xff]
  %v1538 = vld [vmem:[%s11 + $0x2f8] sm:$0xff]
  %v1539 = vld [vmem:[%s11 + $0x300] sm:$0xff]
  %v1540 = vld [vmem:[%s11 + $0x308] sm:$0xff]
  %v1541 = vld [vmem:[%s11 + $0x310] sm:$0xff]
  %v1542 = vld [vmem:[%s11 + $0x318] sm:$0xff]
  %v1543 = vld [vmem:[%s11 + $0x320] sm:$0xff]
  %v1544 = vld [vmem:[%s11 + $0x328] sm:$0xff]
  %v1545 = vld [vmem:[%s11 + $0x330] sm:$0xff]
  %v1546 = vld [vmem:[%s11 + $0x338] sm:$0xff]
  %v1547 = vld [vmem:[%s11 + $0x340] sm:$0xff]
  %v1548 = vld [vmem:[%s11 + $0x348] sm:$0xff]
  %v1549 = vld [vmem:[%s11 + $0x350] sm:$0xff]
  %v1550 = vld [vmem:[%s11 + $0x358] sm:$0xff]
  %v1551 = vld [vmem:[%s11 + $0x360] sm:$0xff]
  %v1552 = vld [vmem:[%s11 + $0x368] sm:$0xff]
  %v1553 = vld [vmem:[%s11 + $0x370] sm:$0xff]
  %v1554 = vld [vmem:[%s11 + $0x378] sm:$0xff]
  %v1555 = vld [vmem:[%s11 + $0x380] sm:$0xff]
  %v1556 = vld [vmem:[%s11 + $0x388] sm:$0xff]
  %v1557 = vld [vmem:[%s11 + $0x390] sm:$0xff]
  %v1558 = vld [vmem:[%s11 + $0x398] sm:$0xff]
  %v1559 = vld [vmem:[%s11 + $0x3a0] sm:$0xff]
  %v1560 = vld [vmem:[%s11 + $0x3a8] sm:$0xff]
  %v1561 = vld [vmem:[%s11 + $0x3b0] sm:$0xff]
  %v1562 = vld [vmem:[%s11 + $0x3b8] sm:$0xff]
  %v1563 = vld [vmem:[%s11 + $0x3c0] sm:$0xff]
  %v1564 = vld [vmem:[%s11 + $0x3c8] sm:$0xff]
  %v1565 = vld [vmem:[%s11 + $0x3d0] sm:$0xff]
  %v1566 = vld [vmem:[%s11 + $0x3d8] sm:$0xff]
  %v1567 = vld [vmem:[%s11 + $0x3e0] sm:$0xff]
  %v1568 = vld [vmem:[%s11 + $0x3e8] sm:$0xff]
  %v1569 = vld [vmem:[%s11 + $0x3f0] sm:$0xff]
  %v1570 = vld [vmem:[%s11 + $0x3f8] sm:$0xff]
  %v1571 = vld [vmem:[%s11 + $0x400] sm:$0x1f]
  %v1572 = vld [vmem:[%s11 + $0x408] sm:$0x1f]
  %v1573 = vld [vmem:[%s12] sm:$0x3]
  %v1575 = vperm.slane %v1573, 0
  %v1576 = vperm.slane %v1573, 1
  %vm1579 = vcmask 39936
  %v1581 = vsel %vm1579, %v1435, 0
  %vm1583 = vcmask 1044480
  %v1585 = vsel %vm1583, %v1571, 0
  %v1588 = vsel %vm1583, %v1572, 0
  %1590 = vmatpush.msra.mxu0 %v1473
  %1591 = vmatpush.msra.mxu0 %v1471
  %1592 = vmatpush.msra.mxu0 %v1469
  %1593 = vmatpush.msra.mxu0 %v1467
  %1594 = vmatpush.msra.mxu0 %v1465
  %1595 = vmatpush.msra.mxu0 %v1463
  %1596 = vmatpush.msra.mxu0 %v1461
  %1597 = vmatpush.msra.mxu0 %v1459
  %1598 = vmatpush.msra.mxu0 %v1457
  %1599 = vmatpush.msra.mxu0 %v1455
  %1600 = vmatpush.msra.mxu0 %v1453
  %1601 = vmatpush.msra.mxu0 %v1451
  %1602 = vmatpush.msra.mxu0 %v1449
  %1603 = vmatpush.msra.mxu0 %v1447
  %1604 = vmatpush.msra.mxu0 %v1445
  %1605 = vmatpush.msra.mxu0 %v1443
  %1606 = vmatmul.f32.gmra.mxu0 %v1434
  %v1607 = vpop.f32.mrf.mxu0
  %v1608 = vadd.f32 %v1575, %v1607
  %1609 = vdwg.mxu0
  %1610 = vmatpush.msra.mxu0 %v1505
  %1611 = vmatpush.msra.mxu0 %v1503
  %1612 = vmatpush.msra.mxu0 %v1501
  %1613 = vmatpush.msra.mxu0 %v1499
  %1614 = vmatpush.msra.mxu0 %v1497
  %1615 = vmatpush.msra.mxu0 %v1495
  %1616 = vmatpush.msra.mxu0 %v1493
  %1617 = vmatpush.msra.mxu0 %v1491
  %1618 = vmatpush.msra.mxu0 %v1489
  %1619 = vmatpush.msra.mxu0 %v1487
  %1620 = vmatpush.msra.mxu0 %v1485
  %1621 = vmatpush.msra.mxu0 %v1483
  %1622 = vmatpush.msra.mxu0 %v1481
  %1623 = vmatpush.msra.mxu0 %v1479
  %1624 = vmatpush.msra.mxu0 %v1477
  %1625 = vmatpush.msra.mxu0 %v1475
  %1626 = vmatmul.f32.gmra.mxu0 %v1437
  %v1627 = vpop.f32.mrf.mxu0
  %v1628 = vadd.f32 %v1608, %v1627
  %1629 = vdwg.mxu0
  %1630 = vmatpush.msra.mxu0 %v1537
  %1631 = vmatpush.msra.mxu0 %v1535
  %1632 = vmatpush.msra.mxu0 %v1533
  %1633 = vmatpush.msra.mxu0 %v1531
  %1634 = vmatpush.msra.mxu0 %v1529
  %1635 = vmatpush.msra.mxu0 %v1527
  %1636 = vmatpush.msra.mxu0 %v1525
  %1637 = vmatpush.msra.mxu0 %v1523
  %1638 = vmatpush.msra.mxu0 %v1521
  %1639 = vmatpush.msra.mxu0 %v1519
  %1640 = vmatpush.msra.mxu0 %v1517
  %1641 = vmatpush.msra.mxu0 %v1515
  %1642 = vmatpush.msra.mxu0 %v1513
  %1643 = vmatpush.msra.mxu0 %v1511
  %1644 = vmatpush.msra.mxu0 %v1509
  %1645 = vmatpush.msra.mxu0 %v1507
  %1646 = vmatmul.f32.gmra.mxu0 %v1439
  %v1647 = vpop.f32.mrf.mxu0
  %v1648 = vadd.f32 %v1628, %v1647
  %1649 = vdwg.mxu0
  %1650 = vmatpush.msra.mxu0 %v1569
  %1651 = vmatpush.msra.mxu0 %v1567
  %1652 = vmatpush.msra.mxu0 %v1565
  %1653 = vmatpush.msra.mxu0 %v1563
  %1654 = vmatpush.msra.mxu0 %v1561
  %1655 = vmatpush.msra.mxu0 %v1559
  %1656 = vmatpush.msra.mxu0 %v1557
  %1657 = vmatpush.msra.mxu0 %v1555
  %1658 = vmatpush.msra.mxu0 %v1553
  %1659 = vmatpush.msra.mxu0 %v1551
  %1660 = vmatpush.msra.mxu0 %v1549
  %1661 = vmatpush.msra.mxu0 %v1547
  %1662 = vmatpush.msra.mxu0 %v1545
  %1663 = vmatpush.msra.mxu0 %v1543
  %1664 = vmatpush.msra.mxu0 %v1541
  %1665 = vmatpush.msra.mxu0 %v1539
  %1666 = vmatmul.f32.gmra.mxu0 %v1441
  %v1667 = vpop.f32.mrf.mxu0
  %v1668 = vadd.f32 %v1648, %v1667
  %1669 = vdwg.mxu0
  %1670 = vmatpush.msra.mxu0 0.0
  %1671 = vmatpush.msra.mxu0 0.0
  %1672 = vmatpush.msra.mxu0 0.0
  %1673 = vmatpush.msra.mxu0 0.0
  %1674 = vmatpush.msra.mxu0 0.0
  %1675 = vmatpush.msra.mxu0 0.0
  %1676 = vmatpush.msra.mxu0 0.0
  %1677 = vmatpush.msra.mxu0 0.0
  %1678 = vmatpush.msra.mxu0 0.0
  %1679 = vmatpush.msra.mxu0 0.0
  %1680 = vmatpush.msra.mxu0 0.0
  %1681 = vmatpush.msra.mxu0 0.0
  %1682 = vmatpush.msra.mxu0 0.0
  %1683 = vmatpush.msra.mxu0 0.0
  %1684 = vmatpush.msra.mxu0 0.0
  %1685 = vmatpush.msra.mxu0 %v1585
  %1686 = vmatmul.f32.gmra.mxu0 %v1581
  %v1687 = vpop.f32.mrf.mxu0
  %v1688 = vadd.f32 %v1668, %v1687
  %1689 = vdwg.mxu0
  %1690 = vmatpush.msra.mxu0 %v1474
  %1691 = vmatpush.msra.mxu0 %v1472
  %1692 = vmatpush.msra.mxu0 %v1470
  %1693 = vmatpush.msra.mxu0 %v1468
  %1694 = vmatpush.msra.mxu0 %v1466
  %1695 = vmatpush.msra.mxu0 %v1464
  %1696 = vmatpush.msra.mxu0 %v1462
  %1697 = vmatpush.msra.mxu0 %v1460
  %1698 = vmatpush.msra.mxu0 %v1458
  %1699 = vmatpush.msra.mxu0 %v1456
  %1700 = vmatpush.msra.mxu0 %v1454
  %1701 = vmatpush.msra.mxu0 %v1452
  %1702 = vmatpush.msra.mxu0 %v1450
  %1703 = vmatpush.msra.mxu0 %v1448
  %1704 = vmatpush.msra.mxu0 %v1446
  %1705 = vmatpush.msra.mxu0 %v1444
  %1706 = vmatmul.f32.gmra.mxu0 %v1434
  %v1707 = vpop.f32.mrf.mxu0
  %v1708 = vadd.f32 %v1576, %v1707
  %1709 = vdwg.mxu0
  %1710 = vmatpush.msra.mxu0 %v1506
  %1711 = vmatpush.msra.mxu0 %v1504
  %1712 = vmatpush.msra.mxu0 %v1502
  %1713 = vmatpush.msra.mxu0 %v1500
  %1714 = vmatpush.msra.mxu0 %v1498
  %1715 = vmatpush.msra.mxu0 %v1496
  %1716 = vmatpush.msra.mxu0 %v1494
  %1717 = vmatpush.msra.mxu0 %v1492
  %1718 = vmatpush.msra.mxu0 %v1490
  %1719 = vmatpush.msra.mxu0 %v1488
  %1720 = vmatpush.msra.mxu0 %v1486
  %1721 = vmatpush.msra.mxu0 %v1484
  %1722 = vmatpush.msra.mxu0 %v1482
  %1723 = vmatpush.msra.mxu0 %v1480
  %1724 = vmatpush.msra.mxu0 %v1478
  %1725 = vmatpush.msra.mxu0 %v1476
  %1726 = vmatmul.f32.gmra.mxu0 %v1437
  %v1727 = vpop.f32.mrf.mxu0
  %v1728 = vadd.f32 %v1708, %v1727
  %1729 = vdwg.mxu0
  %1730 = vmatpush.msra.mxu0 %v1538
  %1731 = vmatpush.msra.mxu0 %v1536
  %1732 = vmatpush.msra.mxu0 %v1534
  %1733 = vmatpush.msra.mxu0 %v1532
  %1734 = vmatpush.msra.mxu0 %v1530
  %1735 = vmatpush.msra.mxu0 %v1528
  %1736 = vmatpush.msra.mxu0 %v1526
  %1737 = vmatpush.msra.mxu0 %v1524
  %1738 = vmatpush.msra.mxu0 %v1522
  %1739 = vmatpush.msra.mxu0 %v1520
  %1740 = vmatpush.msra.mxu0 %v1518
  %1741 = vmatpush.msra.mxu0 %v1516
  %1742 = vmatpush.msra.mxu0 %v1514
  %1743 = vmatpush.msra.mxu0 %v1512
  %1744 = vmatpush.msra.mxu0 %v1510
  %1745 = vmatpush.msra.mxu0 %v1508
  %1746 = vmatmul.f32.gmra.mxu0 %v1439
  %v1747 = vpop.f32.mrf.mxu0
  %v1748 = vadd.f32 %v1728, %v1747
  %1749 = vdwg.mxu0
  %1750 = vmatpush.msra.mxu0 %v1570
  %1751 = vmatpush.msra.mxu0 %v1568
  %1752 = vmatpush.msra.mxu0 %v1566
  %1753 = vmatpush.msra.mxu0 %v1564
  %1754 = vmatpush.msra.mxu0 %v1562
  %1755 = vmatpush.msra.mxu0 %v1560
  %1756 = vmatpush.msra.mxu0 %v1558
  %1757 = vmatpush.msra.mxu0 %v1556
  %1758 = vmatpush.msra.mxu0 %v1554
  %1759 = vmatpush.msra.mxu0 %v1552
  %1760 = vmatpush.msra.mxu0 %v1550
  %1761 = vmatpush.msra.mxu0 %v1548
  %1762 = vmatpush.msra.mxu0 %v1546
  %1763 = vmatpush.msra.mxu0 %v1544
  %1764 = vmatpush.msra.mxu0 %v1542
  %1765 = vmatpush.msra.mxu0 %v1540
  %1766 = vmatmul.f32.gmra.mxu0 %v1441
  %v1767 = vpop.f32.mrf.mxu0
  %v1768 = vadd.f32 %v1748, %v1767
  %1769 = vdwg.mxu0
  %1770 = vmatpush.msra.mxu0 0.0
  %1771 = vmatpush.msra.mxu0 0.0
  %1772 = vmatpush.msra.mxu0 0.0
  %1773 = vmatpush.msra.mxu0 0.0
  %1774 = vmatpush.msra.mxu0 0.0
  %1775 = vmatpush.msra.mxu0 0.0
  %1776 = vmatpush.msra.mxu0 0.0
  %1777 = vmatpush.msra.mxu0 0.0
  %1778 = vmatpush.msra.mxu0 0.0
  %1779 = vmatpush.msra.mxu0 0.0
  %1780 = vmatpush.msra.mxu0 0.0
  %1781 = vmatpush.msra.mxu0 0.0
  %1782 = vmatpush.msra.mxu0 0.0
  %1783 = vmatpush.msra.mxu0 0.0
  %1784 = vmatpush.msra.mxu0 0.0
  %1785 = vmatpush.msra.mxu0 %v1588
  %1786 = vmatmul.f32.gmra.mxu0 %v1581
  %v1787 = vpop.f32.mrf.mxu0
  %v1788 = vadd.f32 %v1768, %v1787
  %1789 = vdwg.mxu0
  %v1790 = vsel %vm835, %v1688, 0.0
  %v1791 = vsel %vm835, %v1788, 0.0
  %v1792 = vadd.f32 %v1790, %v1791
  %1793 = vadd.xlane.f32.xlu0 %v1792
  %v1794 = vpop.xlane.xlu0 %1793
  %v1795 = vrcp.pop 256.0
  %v1796 = vmul.f32 256.0, %v1795
  %v1797 = vsub.f32 1.0, %v1796
  %v1798 = vmul.f32 %v1795, %v1797
  %v1799 = vadd.f32 %v1795, %v1798
  %vm1800 = vweird.f32 %v1795
  %v1801 = vsel %vm1800, %v1795, %v1799
  %v1802 = vmul.f32 %v1794, %v1801
  %v1803 = vsub.f32 %v1688, %v1802
  %v1804 = vsub.f32 %v1788, %v1802
  %v1805 = vmul.f32 %v1803, %v1803
  %v1806 = vmul.f32 %v1804, %v1804
  %v1807 = vsel %vm835, %v1805, 0.0
  %v1808 = vsel %vm835, %v1806, 0.0
  %v1809 = vadd.f32 %v1807, %v1808
  %1810 = vadd.xlane.f32.xlu0 %v1809
  %v1811 = vpop.xlane.xlu0 %1810
  %v1812 = vmul.f32 %v1811, %v1801
  %v1813 = vadd.f32 %v1812, 1e-05
  %v1814 = vrsqrt.pop %v1813
  %v1815 = vmul.f32 %v1814, %v1813
  %v1816 = vmul.f32 %v1815, %v1814
  %v1817 = vmul.f32 0.5, %v1816
  %v1818 = vsub.f32 1.5, %v1817
  %v1819 = vmul.f32 %v1814, %v1818
  %vm1820 = vweird.f32 %v1813
  %vm1821 = vweird.f32 %v1814
  %vm1822 = vmor %vm1820, %vm1821
  %v1823 = vsel %vm1822, %v1814, %v1819
  %v1824 = vmul.f32 %v1803, %v1823
  %v1825 = vmul.f32 %v1804, %v1823
  %v1826 = vld [vmem:[%s13] sm:$0x3]
  %v1828 = vperm.slane %v1826, 0
  %v1829 = vperm.slane %v1826, 1
  %v1832 = vmul.f32 %v1824, %v1828
  %v1833 = vmul.f32 %v1825, %v1829
  %v1834 = vld [vmem:[%s14] sm:$0x3]
  %v1836 = vperm.slane %v1834, 0
  %v1837 = vperm.slane %v1834, 1
  %v1840 = vadd.f32 %v1832, %v1836
  %v1841 = vadd.f32 %v1833, %v1837
  %vm1842 = vcmp.gt.f32.partialorder %v1840, 0.0
  %vm1843 = vcmp.gt.f32.partialorder %v1841, 0.0
  %v1844 = vmul.f32 %v1840, 0.2
  %v1845 = vmul.f32 %v1841, 0.2
  %v1846 = vsel %vm1842, %v1840, %v1844
  %v1847 = vsel %vm1843, %v1841, %v1845
  %v1848 = vld [vmem:[%s15] sm:$0x3]
  %v1850 = vperm.slane %v1848, 0
  %v1851 = vperm.slane %v1848, 1
  %v1854 = vmul.f32 %v1846, %v1850
  %v1855 = vmul.f32 %v1847, %v1851
  %v1856 = vsel %vm835, %v1854, 0.0
  %v1857 = vsel %vm835, %v1855, 0.0
  %v1858 = vadd.f32 %v1856, %v1857
  %1859 = vadd.xlane.f32.xlu0 %v1858
  %v1860 = vpop.xlane.xlu0 %1859
  %v1861 = vld [vmem:[#allocation2] sm:$0x1]
  %v1863 = vperm.slane %v1861, 0
  %v1865 = vadd.f32 %v1860, %v1863
  %v1866 = vxor.u32 %v1865, 2147483648
  %v1867 = vmul.f32 %v1866, 1.442695
  %v1868 = vpow.pop %v1867
  %v1869 = vadd.f32 %v1868, 1.0
  %v1870 = vrcp.pop %v1869
  %v1871 = vmul.f32 %v1869, %v1870
  %v1872 = vsub.f32 1.0, %v1871
  %v1873 = vmul.f32 %v1870, %v1872
  %v1874 = vadd.f32 %v1870, %v1873
  %vm1875 = vweird.f32 %v1869
  %vm1876 = vweird.f32 %v1870
  %vm1877 = vmor %vm1875, %vm1876
  %v1878 = vsel %vm1877, %v1870, %v1874
  %v1879 = vand.u32 2147483647, %v1869
  %vm1880 = vcmp.eq.f32.partialorder %v1879, 8.507059e+37
  %v1881 = vand.u32 %v1869, 2147483648
  %v1882 = vor.u32 1.1754944e-38, %v1881
  %v1883 = vsel %vm1880, %v1882, %v1878
  %v1884 = vmul.f32 1.0, %v1883
  %vm1885 = vcmask 1024
  %1886 = vst.msk [vmem:[%s17] sm:$0x3] %vm1885, %v1884
  // Predicated region
  $region70: #{discriminator_forward.1} parent=0 // pred_check
    _
  $region71: #{discriminator_forward.1} parent=0 // pred_check_branch
    %1888 = sbr.rel (0) target = $region73
  $region72: #{discriminator_forward.1} parent=0 // pred_region
    _
  $region73: #{discriminator_forward.1} parent=0 // pred_fallthru
    _
  // Predicated region
  $region74: #{discriminator_forward.1} parent=0 // pred_check
    _
  $region75: #{discriminator_forward.1} parent=0 // pred_check_branch
    %1890 = sbr.rel (0) target = $region77
  $region76: #{discriminator_forward.1} parent=0 // pred_region
    _
  $region77: #{discriminator_forward.1} parent=0 // pred_fallthru
    _

</llo_original>
